<compile_context>
chip_gen: v7x
topology: tpu7x:2x2x1
jax: 0.10.0
libtpu: 0.0.40
codegen_flags: <defaults>
</compile_context>

<pallas_src>
import functools

import jax
import jax.numpy as jnp
from jax.experimental import pallas as pl
from jax.experimental.pallas import tpu as pltpu


IN_DIM = 28 * 28          # 784 (multiple of 8; taken as a full-extent block)
HID = 360                 # logical hidden size (PyTorch)
HID_PAD = 384             # 360 padded up to a multiple of 128 (NOT 512: extra
                          # pad would add ~78% FLOPs/DMA on w2 for no gain)
LANE = 128


def _round_up(n, m):
    return ((n + m - 1) // m) * m


def encoder_kernel(x_ref, w1_ref, b1_ref, w2_ref, b2_ref, w3_ref, b3_ref, o_ref):
    # Fused 3-layer MLP; bf16 MXU matmuls with f32 accumulation, f32 epilogue.
    # x arrives as f32 from HBM and is cast to bf16 here (in VMEM), so no
    # wrapper-side HBM cast pass is needed.
    x = x_ref[...].astype(jnp.bfloat16)
    h1 = jnp.dot(x, w1_ref[...], preferred_element_type=jnp.float32) + b1_ref[...]
    h1 = jnp.maximum(h1, 0.0).astype(jnp.bfloat16)                     # ReLU
    h2 = jnp.dot(h1, w2_ref[...], preferred_element_type=jnp.float32) + b2_ref[...]
    h2 = jnp.maximum(h2, 0.0).astype(jnp.bfloat16)                     # ReLU
    z = jnp.dot(h2, w3_ref[...], preferred_element_type=jnp.float32) + b3_ref[...]
    o_ref[...] = jax.nn.sigmoid(z).astype(o_ref.dtype)                 # bf16 store


@functools.partial(jax.jit, static_argnames=("latent_dim", "block_b", "full_output"))
def encoder_forward(x, packed_params, *, latent_dim, block_b=1024, full_output=False):
    """x: (B, 1, 28, 28) or (B, 784) float32.

    Returns (B, latent_dim) float32 (torch-equivalent) or, with
    full_output=True, the raw padded (B, 128) bfloat16 slab (padded latent
    columns hold sigmoid(0) = 0.5).
    """
    x2d = x.reshape(-1, IN_DIM)                      # torch's x.view(-1, 784)
    B = x2d.shape[0]
    w1, b1, w2, b2, w3, b3 = packed_params
    lat_pad = w3.shape[1]

    # Batch tile selection:
    #  * small batches: one 16-row-aligned tile (bf16 intermediates pack
    #    16 rows per sublane group; avoids sub-packed relayouts).
    #  * large batches: big tiles to amortize the ~0.35 us/step grid overhead,
    #    but at least 4 tiles so the "parallel" batch axis shards across the
    #    two v7x TensorCores.  Even tb=1024 stays well under 32 MiB of VMEM.
    if B <= 256:
        tb = max(16, _round_up(B, 16))
    else:
        tb = max(256, min(block_b, _round_up(pl.cdiv(B, 4), 16)))
    grid = (pl.cdiv(B, tb),)   # no jnp.pad: Pallas masks the partial last tile

    # Weights/biases are tiny (~1 MiB in bf16) and fully resident in VMEM; only
    # the batch dimension is tiled across the grid.  Constant index_map means
    # they are DMA'd once (double-buffer cost is negligible at this size).
    full = lambda shape: pl.BlockSpec(shape, lambda i: (0, 0))

    out = pl.pallas_call(
        encoder_kernel,
        out_shape=jax.ShapeDtypeStruct((B, lat_pad), jnp.bfloat16),
        grid_spec=pltpu.PrefetchScalarGridSpec(
            num_scalar_prefetch=0,
            grid=grid,
            in_specs=[
                pl.BlockSpec((tb, IN_DIM), lambda i: (i, 0)),   # x tile (f32)
                full((IN_DIM, HID_PAD)),                        # w1 (bf16)
                full((1, HID_PAD)),                             # b1 (f32)
                full((HID_PAD, HID_PAD)),                       # w2 (bf16)
                full((1, HID_PAD)),                             # b2 (f32)
                full((HID_PAD, lat_pad)),                       # w3 (bf16)
                full((1, lat_pad)),                             # b3 (f32)
            ],
            out_specs=pl.BlockSpec((tb, lat_pad), lambda i: (i, 0)),
        ),
        compiler_params=pltpu.CompilerParams(
            dimension_semantics=("parallel",),
            vmem_limit_bytes=32 * 1024 * 1024,   # needed on v5e once tb >= 512
        ),
    )(x2d, w1, b1, w2, b2, w3, b3)

    if full_output:
        return out   # padded (B, 128) bf16 slab; cols >= latent_dim are 0.5
    # Torch-equivalent view.  The remaining column slice/cast only touches the
    # small (B, 128) output slab (<10% of the kernel's own HBM traffic).
    return out[:, :latent_dim].astype(jnp.float32)


def init_params(key, latent_dim):
    """f32 master params mimicking torch.nn.Linear init (U(-1/sqrt(in), 1/sqrt(in)))."""
    ks = jax.random.split(key, 6)

    def linear(kw, kb, fan_in, fan_out):
        bound = 1.0 / jnp.sqrt(fan_in)
        w = jax.random.uniform(kw, (fan_in, fan_out), jnp.float32, -bound, bound)
        b = jax.random.uniform(kb, (fan_out,), jnp.float32, -bound, bound)
        return w, b

    w1, b1 = linear(ks[0], ks[1], IN_DIM, HID)
    w2, b2 = linear(ks[2], ks[3], HID, HID)
    w3, b3 = linear(ks[4], ks[5], HID, latent_dim)
    return (w1, b1, w2, b2, w3, b3)


def pack_params(params):
    """Pad hidden/latent dims to multiples of 128, cast weights to bf16."""
    w1, b1, w2, b2, w3, b3 = params
    latent_dim = w3.shape[1]
    lat_pad = _round_up(latent_dim, LANE)

    def pad_w(w, rows, cols):
        w = jnp.pad(w, ((0, rows - w.shape[0]), (0, cols - w.shape[1])))
        return w.astype(jnp.bfloat16)

    def pad_b(b, cols):
        b = jnp.pad(b.reshape(1, -1), ((0, 0), (0, cols - b.shape[-1])))
        return b.astype(jnp.float32)

    return (
        pad_w(w1, IN_DIM, HID_PAD), pad_b(b1, HID_PAD),
        pad_w(w2, HID_PAD, HID_PAD), pad_b(b2, HID_PAD),
        pad_w(w3, HID_PAD, lat_pad), pad_b(b3, lat_pad),
    )


def encoder_ref(x, params):
    """Pure-JAX f32 reference of the PyTorch forward."""
    x2d = x.reshape(-1, IN_DIM)
    w1, b1, w2, b2, w3, b3 = params
    h = jnp.maximum(x2d @ w1 + b1, 0.0)
    h = jnp.maximum(h @ w2 + b2, 0.0)
    return jax.nn.sigmoid(h @ w3 + b3)


if __name__ == "__main__":
    latent_dim = 32

    key = jax.random.PRNGKey(0)
    k_params, k_x = jax.random.split(key)
    params = init_params(k_params, latent_dim)
    packed = pack_params(params)

    # Small batches: 8 exercises the masked partial tile (tb=16 > B), 64 an
    # exact tile.  Inputs are NCHW like the PyTorch module expects.
    for batch in (8, 64):
        kx = jax.random.fold_in(k_x, batch)
        x = jax.random.normal(kx, (batch, 1, 28, 28), jnp.float32)

        out = jax.block_until_ready(encoder_forward(x, packed, latent_dim=latent_dim))
        ref = encoder_ref(x, params)

        assert out.shape == (batch, latent_dim)
        assert jnp.isfinite(out).all()
        # bf16 matmul inputs / bf16 store -> tolerance loosened vs f32 reference.
        assert jnp.allclose(out, ref, atol=2e-2, rtol=0.0), f"mismatch at batch={batch}"

    print("KERNEL_OK")
</pallas_src>

<mosaic_0001>
module attributes {stable_mosaic.version = 11 : i64} {
  func.func @encoder_kernel(%arg0: i32, %arg1: memref<16x784xf32, #tpu.memory_space<vmem>>, %arg2: memref<784x384xbf16, #tpu.memory_space<vmem>>, %arg3: memref<1x384xf32, #tpu.memory_space<vmem>>, %arg4: memref<384x384xbf16, #tpu.memory_space<vmem>>, %arg5: memref<1x384xf32, #tpu.memory_space<vmem>>, %arg6: memref<384x128xbf16, #tpu.memory_space<vmem>>, %arg7: memref<1x128xf32, #tpu.memory_space<vmem>>, %arg8: memref<16x128xbf16, #tpu.memory_space<vmem>>) attributes {dimension_semantics = [#tpu.dimension_semantics<parallel>], iteration_bounds = array<i64: 1>, scalar_prefetch = 0 : i64, scratch_operands = 0 : i64, tpu.core_type = #tpu.core_type<tc>, window_params = [{transform_indices = @transform_0, window_bounds = array<i64: 16, 784>}, {pipeline_mode = #tpu.pipeline_mode<synchronous>, transform_indices = @transform_1, window_bounds = array<i64: 784, 384>}, {pipeline_mode = #tpu.pipeline_mode<synchronous>, transform_indices = @transform_2, window_bounds = array<i64: 1, 384>}, {pipeline_mode = #tpu.pipeline_mode<synchronous>, transform_indices = @transform_3, window_bounds = array<i64: 384, 384>}, {pipeline_mode = #tpu.pipeline_mode<synchronous>, transform_indices = @transform_4, window_bounds = array<i64: 1, 384>}, {pipeline_mode = #tpu.pipeline_mode<synchronous>, transform_indices = @transform_5, window_bounds = array<i64: 384, 128>}, {pipeline_mode = #tpu.pipeline_mode<synchronous>, transform_indices = @transform_6, window_bounds = array<i64: 1, 128>}, {transform_indices = @transform_7, window_bounds = array<i64: 16, 128>}]} {
    %c0 = arith.constant 0 : index
    %c0_0 = arith.constant 0 : index
    %0 = vector.load %arg1[%c0, %c0_0] : memref<16x784xf32, #tpu.memory_space<vmem>>, vector<16x784xf32>
    %1 = arith.truncf %0 : vector<16x784xf32> to vector<16x784xbf16>
    %c0_1 = arith.constant 0 : index
    %c0_2 = arith.constant 0 : index
    %2 = vector.load %arg2[%c0_1, %c0_2] : memref<784x384xbf16, #tpu.memory_space<vmem>>, vector<784x384xbf16>
    %cst = arith.constant dense<0.000000e+00> : vector<16x384xf32>
    %3 = tpu.matmul %1, %2, %cst {dimension_numbers = #tpu.dot_dimension_numbers<[1], [0], [0], [1], [0, 0, 1, 1], [], []>} : vector<16x784xbf16>, vector<784x384xbf16>, vector<16x384xf32> -> vector<16x384xf32>
    %c0_3 = arith.constant 0 : index
    %c0_4 = arith.constant 0 : index
    %4 = vector.load %arg3[%c0_3, %c0_4] : memref<1x384xf32, #tpu.memory_space<vmem>>, vector<1x384xf32>
    %5 = vector.broadcast %4 : vector<1x384xf32> to vector<16x384xf32>
    %6 = arith.addf %3, %5 : vector<16x384xf32>
    %cst_5 = arith.constant 0.000000e+00 : f32
    %7 = vector.broadcast %cst_5 : f32 to vector<16x384xf32>
    %8 = arith.maximumf %6, %7 : vector<16x384xf32>
    %9 = arith.truncf %8 : vector<16x384xf32> to vector<16x384xbf16>
    %c0_6 = arith.constant 0 : index
    %c0_7 = arith.constant 0 : index
    %10 = vector.load %arg4[%c0_6, %c0_7] : memref<384x384xbf16, #tpu.memory_space<vmem>>, vector<384x384xbf16>
    %cst_8 = arith.constant dense<0.000000e+00> : vector<16x384xf32>
    %11 = tpu.matmul %9, %10, %cst_8 {dimension_numbers = #tpu.dot_dimension_numbers<[1], [0], [0], [1], [0, 0, 1, 1], [], []>} : vector<16x384xbf16>, vector<384x384xbf16>, vector<16x384xf32> -> vector<16x384xf32>
    %c0_9 = arith.constant 0 : index
    %c0_10 = arith.constant 0 : index
    %12 = vector.load %arg5[%c0_9, %c0_10] : memref<1x384xf32, #tpu.memory_space<vmem>>, vector<1x384xf32>
    %13 = vector.broadcast %12 : vector<1x384xf32> to vector<16x384xf32>
    %14 = arith.addf %11, %13 : vector<16x384xf32>
    %cst_11 = arith.constant 0.000000e+00 : f32
    %15 = vector.broadcast %cst_11 : f32 to vector<16x384xf32>
    %16 = arith.maximumf %14, %15 : vector<16x384xf32>
    %17 = arith.truncf %16 : vector<16x384xf32> to vector<16x384xbf16>
    %c0_12 = arith.constant 0 : index
    %c0_13 = arith.constant 0 : index
    %18 = vector.load %arg6[%c0_12, %c0_13] : memref<384x128xbf16, #tpu.memory_space<vmem>>, vector<384x128xbf16>
    %cst_14 = arith.constant dense<0.000000e+00> : vector<16x128xf32>
    %19 = tpu.matmul %17, %18, %cst_14 {dimension_numbers = #tpu.dot_dimension_numbers<[1], [0], [0], [1], [0, 0, 1, 1], [], []>} : vector<16x384xbf16>, vector<384x128xbf16>, vector<16x128xf32> -> vector<16x128xf32>
    %c0_15 = arith.constant 0 : index
    %c0_16 = arith.constant 0 : index
    %20 = vector.load %arg7[%c0_15, %c0_16] : memref<1x128xf32, #tpu.memory_space<vmem>>, vector<1x128xf32>
    %21 = vector.broadcast %20 : vector<1x128xf32> to vector<16x128xf32>
    %22 = arith.addf %19, %21 : vector<16x128xf32>
    %23 = arith.negf %22 : vector<16x128xf32>
    %24 = math.exp %23 : vector<16x128xf32>
    %cst_17 = arith.constant 1.000000e+00 : f32
    %25 = vector.broadcast %cst_17 : f32 to vector<16x128xf32>
    %26 = arith.addf %25, %24 : vector<16x128xf32>
    %27 = arith.divf %25, %26 : vector<16x128xf32>
    %28 = arith.truncf %27 : vector<16x128xf32> to vector<16x128xbf16>
    %c0_18 = arith.constant 0 : index
    %c0_19 = arith.constant 0 : index
    %29 = vector.load %arg8[%c0_18, %c0_19] : memref<16x128xbf16, #tpu.memory_space<vmem>>, vector<16x128xbf16>
    tpu.vector_store %arg8[%c0_18, %c0_19], %28 {strides = array<i32>} : memref<16x128xbf16, #tpu.memory_space<vmem>>, vector<16x128xbf16>,
    return
  }
  func.func @transform_0(%arg0: i32) -> (i32, i32) {
    %c0_i32 = arith.constant 0 : i32
    %c0_i32_0 = arith.constant 0 : i32
    return %arg0, %c0_i32 : i32, i32
  }
  func.func @transform_1(%arg0: i32) -> (i32, i32) {
    %c0_i32 = arith.constant 0 : i32
    %c0_i32_0 = arith.constant 0 : i32
    %c0_i32_1 = arith.constant 0 : i32
    return %c0_i32, %c0_i32_0 : i32, i32
  }
  func.func @transform_2(%arg0: i32) -> (i32, i32) {
    %c0_i32 = arith.constant 0 : i32
    %c0_i32_0 = arith.constant 0 : i32
    %c0_i32_1 = arith.constant 0 : i32
    return %c0_i32, %c0_i32_0 : i32, i32
  }
  func.func @transform_3(%arg0: i32) -> (i32, i32) {
    %c0_i32 = arith.constant 0 : i32
    %c0_i32_0 = arith.constant 0 : i32
    %c0_i32_1 = arith.constant 0 : i32
    return %c0_i32, %c0_i32_0 : i32, i32
  }
  func.func @transform_4(%arg0: i32) -> (i32, i32) {
    %c0_i32 = arith.constant 0 : i32
    %c0_i32_0 = arith.constant 0 : i32
    %c0_i32_1 = arith.constant 0 : i32
    return %c0_i32, %c0_i32_0 : i32, i32
  }
  func.func @transform_5(%arg0: i32) -> (i32, i32) {
    %c0_i32 = arith.constant 0 : i32
    %c0_i32_0 = arith.constant 0 : i32
    %c0_i32_1 = arith.constant 0 : i32
    return %c0_i32, %c0_i32_0 : i32, i32
  }
  func.func @transform_6(%arg0: i32) -> (i32, i32) {
    %c0_i32 = arith.constant 0 : i32
    %c0_i32_0 = arith.constant 0 : i32
    %c0_i32_1 = arith.constant 0 : i32
    return %c0_i32, %c0_i32_0 : i32, i32
  }
  func.func @transform_7(%arg0: i32) -> (i32, i32) {
    %c0_i32 = arith.constant 0 : i32
    %c0_i32_0 = arith.constant 0 : i32
    return %arg0, %c0_i32 : i32, i32
  }
}

</mosaic_0001>

<llo_original>
// kernel: encoder_forward.1
$region0: #{encoder_forward.1}
  #allocation0 [shape = 'u32[]', space=smem, size = 0x4, offset = 0x4, fixed_abs, tag = 'smem constant byte address 0x4 - core index']
  #allocation1 [shape = 'u32[144,128]{1,0:T(1,128)}', space=vmem, size = 0x12000, scoped, tag = 'internal scratch']
  %s0 = inlined_call_operand.vmem [shape: f32[8,784], index: 0, kind: input, shape index: {}]
  %s1 = inlined_call_operand.hbm [shape: bf16[784,384], index: 1, kind: input, shape index: {}]
  %s2 = inlined_call_operand.vmem [shape: f32[1,384], index: 2, kind: input, shape index: {}]
  %s3 = inlined_call_operand.vmem [shape: bf16[384,384], index: 3, kind: input, shape index: {}]
  %s4 = inlined_call_operand.vmem [shape: f32[1,384], index: 4, kind: input, shape index: {}]
  %s5 = inlined_call_operand.vmem [shape: bf16[384,128], index: 5, kind: input, shape index: {}]
  %s6 = inlined_call_operand.vmem [shape: f32[1,128], index: 6, kind: input, shape index: {}]
  %s7 = inlined_call_operand.vmem [shape: bf16[8,128], index: 7, kind: output, shape index: {}]
  %s8 = sld [smem:[#allocation0]]
  $region72: #{encoder_forward.1} parent=0
    _
  %s10 = ssub.s32 1, %s8
  %s11 = scalar_select 0, %s10, %s8
  $region1: #{encoder_forward.1} parent=0
    #allocation2 [shape = 'u8[602112]{0}', space=vmem, size = 0x93000, scoped, tag = 'input window, operand 1, single buffered']
    #allocation3 [shape = 's32[1]{0}', space=sflag, size = 0x4, scoped, tag = 'scoped memory for encoder_forward.1']
    #allocation4 [shape = 'u8[4096]{0}', space=vmem, size = 0x1000, scoped, tag = 'output window, operand 0, single buffered']
    %12 = vsyncpa [#allocation3], 0
    // Predicated region
    $region2: #{encoder_forward.1} parent=1 // pred_check
      _
    $region3: #{encoder_forward.1} parent=1 // pred_check_branch
      %14 = sbr.rel (0) target = $region5
    $region4: #{encoder_forward.1} parent=1 // pred_region
      _
    $region5: #{encoder_forward.1} parent=1 // pred_fallthru
      _
    // Predicated region
    $region6: #{encoder_forward.1} parent=1 // pred_check
      _
    $region7: #{encoder_forward.1} parent=1 // pred_check_branch
      %16 = sbr.rel (0) target = $region9
    $region8: #{encoder_forward.1} parent=1 // pred_region
      %s18 = ssub.s32 18816, 18816
      %19 = vsyncadd [#allocation3], %s18
      %s20 = sshll.u32 [#allocation2], 4
      %s21 = int_to_ptr.vmem [resolvable:$true] %s20
      %26 = dma.hbm_to_vmem [thread:$0]  %s1, 18816, %s21, [#allocation3], 192, 192, 12
    $region9: #{encoder_forward.1} parent=1 // pred_fallthru
      _
    // Predicated region
    $region10: #{encoder_forward.1} parent=1 // pred_check
      _
    $region11: #{encoder_forward.1} parent=1 // pred_check_branch
      %28 = sbr.rel (0) target = $region13
    $region12: #{encoder_forward.1} parent=1 // pred_region
      _
    $region13: #{encoder_forward.1} parent=1 // pred_fallthru
      _
    // Predicated region
    $region14: #{encoder_forward.1} parent=1 // pred_check
      _
    $region15: #{encoder_forward.1} parent=1 // pred_check_branch
      %30 = sbr.rel (0) target = $region17
    $region16: #{encoder_forward.1} parent=1 // pred_region
      _
    $region17: #{encoder_forward.1} parent=1 // pred_fallthru
      _
    // Predicated region
    $region18: #{encoder_forward.1} parent=1 // pred_check
      _
    $region19: #{encoder_forward.1} parent=1 // pred_check_branch
      %32 = sbr.rel (0) target = $region21
    $region20: #{encoder_forward.1} parent=1 // pred_region
      _
    $region21: #{encoder_forward.1} parent=1 // pred_fallthru
      _
    // Predicated region
    $region22: #{encoder_forward.1} parent=1 // pred_check
      _
    $region23: #{encoder_forward.1} parent=1 // pred_check_branch
      %34 = sbr.rel (0) target = $region25
    $region24: #{encoder_forward.1} parent=1 // pred_region
      _
    $region25: #{encoder_forward.1} parent=1 // pred_fallthru
      _
    // Predicated region
    $region26: #{encoder_forward.1} parent=1 // pred_check
      _
    $region27: #{encoder_forward.1} parent=1 // pred_check_branch
      %36 = sbr.rel (0) target = $region29
    $region28: #{encoder_forward.1} parent=1 // pred_region
      _
    $region29: #{encoder_forward.1} parent=1 // pred_fallthru
      _
    // Predicated region
    $region30: #{encoder_forward.1} parent=1 // pred_check
      _
    $region31: #{encoder_forward.1} parent=1 // pred_check_branch
      %38 = sbr.rel (0) target = $region33
    $region32: #{encoder_forward.1} parent=1 // pred_region
      %39 = dma.done [#allocation3], 18816
    $region33: #{encoder_forward.1} parent=1 // pred_fallthru
      _
    %v41 = vld [vmem:[%s0] sm:$0xff]
    %v42 = vld [vmem:[%s0 + $0x8] sm:$0xff]
    %v43 = vld [vmem:[%s0 + $0x10] sm:$0xff]
    %v44 = vld [vmem:[%s0 + $0x18] sm:$0xff]
    %v45 = vld [vmem:[%s0 + $0x20] sm:$0xff]
    %v46 = vld [vmem:[%s0 + $0x28] sm:$0xff]
    %v47 = vld [vmem:[%s0 + $0x30] sm:$0xff]
    %v48 = vld [vmem:[%s0 + $0x38] sm:$0xff]
    %v49 = vld [vmem:[%s0 + $0x40] sm:$0xff]
    %v50 = vld [vmem:[%s0 + $0x48] sm:$0xff]
    %v51 = vld [vmem:[%s0 + $0x50] sm:$0xff]
    %v52 = vld [vmem:[%s0 + $0x58] sm:$0xff]
    %v53 = vld [vmem:[%s0 + $0x60] sm:$0xff]
    %v54 = vld [vmem:[%s0 + $0x68] sm:$0xff]
    %v55 = vpack.c.bf16 %v48, %v41
    %v56 = vpack.c.bf16 %v49, %v42
    %v57 = vpack.c.bf16 %v50, %v43
    %v58 = vpack.c.bf16 %v51, %v44
    %v59 = vpack.c.bf16 %v52, %v45
    %v60 = vpack.c.bf16 %v53, %v46
    %v61 = vpack.c.bf16 %v54, %v47
    %v62 = vld [vmem:[#allocation2] sm:$0xff]
    %v63 = vld [vmem:[#allocation2 + $0x8] sm:$0xf]
    %v64 = vld [vmem:[#allocation2 + $0xc] sm:$0xff]
    %v65 = vld [vmem:[#allocation2 + $0x14] sm:$0xf]
    %v66 = vld [vmem:[#allocation2 + $0x18] sm:$0xff]
    %v67 = vld [vmem:[#allocation2 + $0x20] sm:$0xf]
    %v68 = vld [vmem:[#allocation2 + $0x24] sm:$0xff]
    %v69 = vld [vmem:[#allocation2 + $0x2c] sm:$0xf]
    %v70 = vld [vmem:[#allocation2 + $0x30] sm:$0xff]
    %v71 = vld [vmem:[#allocation2 + $0x38] sm:$0xf]
    %v72 = vld [vmem:[#allocation2 + $0x3c] sm:$0xff]
    %v73 = vld [vmem:[#allocation2 + $0x44] sm:$0xf]
    %v74 = vld [vmem:[#allocation2 + $0x48] sm:$0xff]
    %v75 = vld [vmem:[#allocation2 + $0x50] sm:$0xf]
    %v76 = vld [vmem:[#allocation2 + $0x54] sm:$0xff]
    %v77 = vld [vmem:[#allocation2 + $0x5c] sm:$0xf]
    %v78 = vld [vmem:[#allocation2 + $0x60] sm:$0xff]
    %v79 = vld [vmem:[#allocation2 + $0x68] sm:$0xf]
    %v80 = vld [vmem:[#allocation2 + $0x6c] sm:$0xff]
    %v81 = vld [vmem:[#allocation2 + $0x74] sm:$0xf]
    %v82 = vld [vmem:[#allocation2 + $0x78] sm:$0xff]
    %v83 = vld [vmem:[#allocation2 + $0x80] sm:$0xf]
    %v84 = vld [vmem:[#allocation2 + $0x84] sm:$0xff]
    %v85 = vld [vmem:[#allocation2 + $0x8c] sm:$0xf]
    %v86 = vld [vmem:[#allocation2 + $0x90] sm:$0xff]
    %v87 = vld [vmem:[#allocation2 + $0x98] sm:$0xf]
    %v88 = vld [vmem:[#allocation2 + $0x9c] sm:$0xff]
    %v89 = vld [vmem:[#allocation2 + $0xa4] sm:$0xf]
    %v90 = vld [vmem:[#allocation2 + $0xa8] sm:$0xff]
    %v91 = vld [vmem:[#allocation2 + $0xb0] sm:$0xf]
    %v92 = vld [vmem:[#allocation2 + $0xb4] sm:$0xff]
    %v93 = vld [vmem:[#allocation2 + $0xbc] sm:$0xf]
    %v94 = vld [vmem:[#allocation2 + $0xc0] sm:$0xff]
    %v95 = vld [vmem:[#allocation2 + $0xc8] sm:$0xf]
    %v96 = vld [vmem:[#allocation2 + $0xcc] sm:$0xff]
    %v97 = vld [vmem:[#allocation2 + $0xd4] sm:$0xf]
    %v98 = vld [vmem:[#allocation2 + $0xd8] sm:$0xff]
    %v99 = vld [vmem:[#allocation2 + $0xe0] sm:$0xf]
    %v100 = vld [vmem:[#allocation2 + $0xe4] sm:$0xff]
    %v101 = vld [vmem:[#allocation2 + $0xec] sm:$0xf]
    %v102 = vld [vmem:[#allocation2 + $0xf0] sm:$0xff]
    %v103 = vld [vmem:[#allocation2 + $0xf8] sm:$0xf]
    %v104 = vld [vmem:[#allocation2 + $0xfc] sm:$0xff]
    %v105 = vld [vmem:[#allocation2 + $0x104] sm:$0xf]
    %v106 = vld [vmem:[#allocation2 + $0x108] sm:$0xff]
    %v107 = vld [vmem:[#allocation2 + $0x110] sm:$0xf]
    %v108 = vld [vmem:[#allocation2 + $0x114] sm:$0xff]
    %v109 = vld [vmem:[#allocation2 + $0x11c] sm:$0xf]
    %v110 = vld [vmem:[#allocation2 + $0x120] sm:$0xff]
    %v111 = vld [vmem:[#allocation2 + $0x128] sm:$0xf]
    %v112 = vld [vmem:[#allocation2 + $0x12c] sm:$0xff]
    %v113 = vld [vmem:[#allocation2 + $0x134] sm:$0xf]
    %v114 = vld [vmem:[#allocation2 + $0x138] sm:$0xff]
    %v115 = vld [vmem:[#allocation2 + $0x140] sm:$0xf]
    %v116 = vld [vmem:[#allocation2 + $0x144] sm:$0xff]
    %v117 = vld [vmem:[#allocation2 + $0x14c] sm:$0xf]
    %v118 = vld [vmem:[#allocation2 + $0x150] sm:$0xff]
    %v119 = vld [vmem:[#allocation2 + $0x158] sm:$0xf]
    %v120 = vld [vmem:[#allocation2 + $0x15c] sm:$0xff]
    %v121 = vld [vmem:[#allocation2 + $0x164] sm:$0xf]
    %v122 = vld [vmem:[#allocation2 + $0x168] sm:$0xff]
    %v123 = vld [vmem:[#allocation2 + $0x170] sm:$0xf]
    %v124 = vld [vmem:[#allocation2 + $0x174] sm:$0xff]
    %v125 = vld [vmem:[#allocation2 + $0x17c] sm:$0xf]
    %v126 = vld [vmem:[#allocation2 + $0x180] sm:$0xff]
    %v127 = vld [vmem:[#allocation2 + $0x188] sm:$0xf]
    %v128 = vld [vmem:[#allocation2 + $0x18c] sm:$0xff]
    %v129 = vld [vmem:[#allocation2 + $0x194] sm:$0xf]
    %v130 = vld [vmem:[#allocation2 + $0x198] sm:$0xff]
    %v131 = vld [vmem:[#allocation2 + $0x1a0] sm:$0xf]
    %v132 = vld [vmem:[#allocation2 + $0x1a4] sm:$0xff]
    %v133 = vld [vmem:[#allocation2 + $0x1ac] sm:$0xf]
    %v134 = vld [vmem:[#allocation2 + $0x1b0] sm:$0xff]
    %v135 = vld [vmem:[#allocation2 + $0x1b8] sm:$0xf]
    %v136 = vld [vmem:[#allocation2 + $0x1bc] sm:$0xff]
    %v137 = vld [vmem:[#allocation2 + $0x1c4] sm:$0xf]
    %v138 = vld [vmem:[#allocation2 + $0x1c8] sm:$0xff]
    %v139 = vld [vmem:[#allocation2 + $0x1d0] sm:$0xf]
    %v140 = vld [vmem:[#allocation2 + $0x1d4] sm:$0xff]
    %v141 = vld [vmem:[#allocation2 + $0x1dc] sm:$0xf]
    %v142 = vld [vmem:[#allocation2 + $0x1e0] sm:$0xff]
    %v143 = vld [vmem:[#allocation2 + $0x1e8] sm:$0xf]
    %v144 = vld [vmem:[#allocation2 + $0x1ec] sm:$0xff]
    %v145 = vld [vmem:[#allocation2 + $0x1f4] sm:$0xf]
    %v146 = vld [vmem:[#allocation2 + $0x1f8] sm:$0xff]
    %v147 = vld [vmem:[#allocation2 + $0x200] sm:$0xf]
    %v148 = vld [vmem:[#allocation2 + $0x204] sm:$0xff]
    %v149 = vld [vmem:[#allocation2 + $0x20c] sm:$0xf]
    %v150 = vld [vmem:[#allocation2 + $0x210] sm:$0xff]
    %v151 = vld [vmem:[#allocation2 + $0x218] sm:$0xf]
    %v152 = vld [vmem:[#allocation2 + $0x21c] sm:$0xff]
    %v153 = vld [vmem:[#allocation2 + $0x224] sm:$0xf]
    %v154 = vld [vmem:[#allocation2 + $0x228] sm:$0xff]
    %v155 = vld [vmem:[#allocation2 + $0x230] sm:$0xf]
    %v156 = vld [vmem:[#allocation2 + $0x234] sm:$0xff]
    %v157 = vld [vmem:[#allocation2 + $0x23c] sm:$0xf]
    %v158 = vld [vmem:[#allocation2 + $0x240] sm:$0xff]
    %v159 = vld [vmem:[#allocation2 + $0x248] sm:$0xf]
    %v160 = vld [vmem:[#allocation2 + $0x24c] sm:$0xff]
    %v161 = vld [vmem:[#allocation2 + $0x254] sm:$0xf]
    %v162 = vld [vmem:[#allocation2 + $0x258] sm:$0xff]
    %v163 = vld [vmem:[#allocation2 + $0x260] sm:$0xf]
    %v164 = vld [vmem:[#allocation2 + $0x264] sm:$0xff]
    %v165 = vld [vmem:[#allocation2 + $0x26c] sm:$0xf]
    %v166 = vld [vmem:[#allocation2 + $0x270] sm:$0xff]
    %v167 = vld [vmem:[#allocation2 + $0x278] sm:$0xf]
    %v168 = vld [vmem:[#allocation2 + $0x27c] sm:$0xff]
    %v169 = vld [vmem:[#allocation2 + $0x284] sm:$0xf]
    %v170 = vld [vmem:[#allocation2 + $0x288] sm:$0xff]
    %v171 = vld [vmem:[#allocation2 + $0x290] sm:$0xf]
    %v172 = vld [vmem:[#allocation2 + $0x294] sm:$0xff]
    %v173 = vld [vmem:[#allocation2 + $0x29c] sm:$0xf]
    %v174 = vld [vmem:[#allocation2 + $0x2a0] sm:$0xff]
    %v175 = vld [vmem:[#allocation2 + $0x2a8] sm:$0xf]
    %v176 = vld [vmem:[#allocation2 + $0x2ac] sm:$0xff]
    %v177 = vld [vmem:[#allocation2 + $0x2b4] sm:$0xf]
    %v178 = vld [vmem:[#allocation2 + $0x2b8] sm:$0xff]
    %v179 = vld [vmem:[#allocation2 + $0x2c0] sm:$0xf]
    %v180 = vld [vmem:[#allocation2 + $0x2c4] sm:$0xff]
    %v181 = vld [vmem:[#allocation2 + $0x2cc] sm:$0xf]
    %v182 = vld [vmem:[#allocation2 + $0x2d0] sm:$0xff]
    %v183 = vld [vmem:[#allocation2 + $0x2d8] sm:$0xf]
    %v184 = vld [vmem:[#allocation2 + $0x2dc] sm:$0xff]
    %v185 = vld [vmem:[#allocation2 + $0x2e4] sm:$0xf]
    %v186 = vld [vmem:[#allocation2 + $0x2e8] sm:$0xff]
    %v187 = vld [vmem:[#allocation2 + $0x2f0] sm:$0xf]
    %v188 = vld [vmem:[#allocation2 + $0x2f4] sm:$0xff]
    %v189 = vld [vmem:[#allocation2 + $0x2fc] sm:$0xf]
    %v190 = vld [vmem:[#allocation2 + $0x300] sm:$0xff]
    %v191 = vld [vmem:[#allocation2 + $0x308] sm:$0xf]
    %v192 = vld [vmem:[#allocation2 + $0x30c] sm:$0xff]
    %v193 = vld [vmem:[#allocation2 + $0x314] sm:$0xf]
    %v194 = vld [vmem:[#allocation2 + $0x318] sm:$0xff]
    %v195 = vld [vmem:[#allocation2 + $0x320] sm:$0xf]
    %v196 = vld [vmem:[#allocation2 + $0x324] sm:$0xff]
    %v197 = vld [vmem:[#allocation2 + $0x32c] sm:$0xf]
    %v198 = vld [vmem:[#allocation2 + $0x330] sm:$0xff]
    %v199 = vld [vmem:[#allocation2 + $0x338] sm:$0xf]
    %v200 = vld [vmem:[#allocation2 + $0x33c] sm:$0xff]
    %v201 = vld [vmem:[#allocation2 + $0x344] sm:$0xf]
    %v202 = vld [vmem:[#allocation2 + $0x348] sm:$0xff]
    %v203 = vld [vmem:[#allocation2 + $0x350] sm:$0xf]
    %v204 = vld [vmem:[#allocation2 + $0x354] sm:$0xff]
    %v205 = vld [vmem:[#allocation2 + $0x35c] sm:$0xf]
    %v206 = vld [vmem:[#allocation2 + $0x360] sm:$0xff]
    %v207 = vld [vmem:[#allocation2 + $0x368] sm:$0xf]
    %v208 = vld [vmem:[#allocation2 + $0x36c] sm:$0xff]
    %v209 = vld [vmem:[#allocation2 + $0x374] sm:$0xf]
    %v210 = vld [vmem:[#allocation2 + $0x378] sm:$0xff]
    %v211 = vld [vmem:[#allocation2 + $0x380] sm:$0xf]
    %v212 = vld [vmem:[#allocation2 + $0x384] sm:$0xff]
    %v213 = vld [vmem:[#allocation2 + $0x38c] sm:$0xf]
    %v214 = vld [vmem:[#allocation2 + $0x390] sm:$0xff]
    %v215 = vld [vmem:[#allocation2 + $0x398] sm:$0xf]
    %v216 = vld [vmem:[#allocation2 + $0x39c] sm:$0xff]
    %v217 = vld [vmem:[#allocation2 + $0x3a4] sm:$0xf]
    %v218 = vld [vmem:[#allocation2 + $0x3a8] sm:$0xff]
    %v219 = vld [vmem:[#allocation2 + $0x3b0] sm:$0xf]
    %v220 = vld [vmem:[#allocation2 + $0x3b4] sm:$0xff]
    %v221 = vld [vmem:[#allocation2 + $0x3bc] sm:$0xf]
    %v222 = vld [vmem:[#allocation2 + $0x3c0] sm:$0xff]
    %v223 = vld [vmem:[#allocation2 + $0x3c8] sm:$0xf]
    %v224 = vld [vmem:[#allocation2 + $0x3cc] sm:$0xff]
    %v225 = vld [vmem:[#allocation2 + $0x3d4] sm:$0xf]
    %v226 = vld [vmem:[#allocation2 + $0x3d8] sm:$0xff]
    %v227 = vld [vmem:[#allocation2 + $0x3e0] sm:$0xf]
    %v228 = vld [vmem:[#allocation2 + $0x3e4] sm:$0xff]
    %v229 = vld [vmem:[#allocation2 + $0x3ec] sm:$0xf]
    %v230 = vld [vmem:[#allocation2 + $0x3f0] sm:$0xff]
    %v231 = vld [vmem:[#allocation2 + $0x3f8] sm:$0xf]
    %v232 = vld [vmem:[#allocation2 + $0x3fc] sm:$0xff]
    %v233 = vld [vmem:[#allocation2 + $0x404] sm:$0xf]
    %v234 = vld [vmem:[#allocation2 + $0x408] sm:$0xff]
    %v235 = vld [vmem:[#allocation2 + $0x410] sm:$0xf]
    %v236 = vld [vmem:[#allocation2 + $0x414] sm:$0xff]
    %v237 = vld [vmem:[#allocation2 + $0x41c] sm:$0xf]
    %v238 = vld [vmem:[#allocation2 + $0x420] sm:$0xff]
    %v239 = vld [vmem:[#allocation2 + $0x428] sm:$0xf]
    %v240 = vld [vmem:[#allocation2 + $0x42c] sm:$0xff]
    %v241 = vld [vmem:[#allocation2 + $0x434] sm:$0xf]
    %v242 = vld [vmem:[#allocation2 + $0x438] sm:$0xff]
    %v243 = vld [vmem:[#allocation2 + $0x440] sm:$0xf]
    %v244 = vld [vmem:[#allocation2 + $0x444] sm:$0xff]
    %v245 = vld [vmem:[#allocation2 + $0x44c] sm:$0xf]
    %v246 = vld [vmem:[#allocation2 + $0x450] sm:$0xff]
    %v247 = vld [vmem:[#allocation2 + $0x458] sm:$0xf]
    %v248 = vld [vmem:[#allocation2 + $0x45c] sm:$0xff]
    %v249 = vld [vmem:[#allocation2 + $0x464] sm:$0xf]
    %v250 = vld [vmem:[#allocation2 + $0x468] sm:$0xff]
    %v251 = vld [vmem:[#allocation2 + $0x470] sm:$0xf]
    %v252 = vld [vmem:[#allocation2 + $0x474] sm:$0xff]
    %v253 = vld [vmem:[#allocation2 + $0x47c] sm:$0xf]
    %v254 = vld [vmem:[#allocation2 + $0x480] sm:$0xff]
    %v255 = vld [vmem:[#allocation2 + $0x488] sm:$0xf]
    %v256 = vld [vmem:[#allocation2 + $0x48c] sm:$0xff]
    %v257 = vld [vmem:[#allocation2 + $0x494] sm:$0xf]
    %v258 = vld [vmem:[%s2] sm:$0x7]
    %v260 = vlaneseq
    %v261 = vshrl.u32 %v260, 7
    %v262 = vsub.s32 0, %v261
    %v263 = vrot.slane %v258, %v262
    %v264 = vlaneseq
    %v265 = vshrl.u32 %v264, 7
    %v266 = vsub.s32 1, %v265
    %v267 = vrot.slane %v258, %v266
    %v268 = vlaneseq
    %v269 = vshrl.u32 %v268, 7
    %v270 = vsub.s32 2, %v269
    %v271 = vrot.slane %v258, %v270
    %v471 = vunpack.c.l.b16 %v62
    %v472 = vunpack.c.h.b16 %v62
    %v473 = vunpack.c.l.b16 %v63
    %v474 = vunpack.c.l.b16 %v64
    %v475 = vunpack.c.h.b16 %v64
    %v476 = vunpack.c.l.b16 %v65
    %v477 = vunpack.c.l.b16 %v66
    %v478 = vunpack.c.h.b16 %v66
    %v479 = vunpack.c.l.b16 %v67
    %v480 = vunpack.c.l.b16 %v68
    %v481 = vunpack.c.h.b16 %v68
    %v482 = vunpack.c.l.b16 %v69
    %v483 = vunpack.c.l.b16 %v70
    %v484 = vunpack.c.h.b16 %v70
    %v485 = vunpack.c.l.b16 %v71
    %v486 = vunpack.c.l.b16 %v72
    %v487 = vunpack.c.h.b16 %v72
    %v488 = vunpack.c.l.b16 %v73
    %v489 = vunpack.c.l.b16 %v74
    %v490 = vunpack.c.h.b16 %v74
    %v491 = vunpack.c.l.b16 %v75
    %v492 = vunpack.c.l.b16 %v76
    %v493 = vunpack.c.h.b16 %v76
    %v494 = vunpack.c.l.b16 %v77
    %v495 = vunpack.c.l.b16 %v78
    %v496 = vunpack.c.h.b16 %v78
    %v497 = vunpack.c.l.b16 %v79
    %v498 = vunpack.c.l.b16 %v80
    %v499 = vunpack.c.h.b16 %v80
    %v500 = vunpack.c.l.b16 %v81
    %v501 = vunpack.c.l.b16 %v82
    %v502 = vunpack.c.h.b16 %v82
    %v503 = vunpack.c.l.b16 %v83
    %v504 = vunpack.c.l.b16 %v84
    %v505 = vunpack.c.h.b16 %v84
    %v506 = vunpack.c.l.b16 %v85
    %v507 = vunpack.c.l.b16 %v86
    %v508 = vunpack.c.h.b16 %v86
    %v509 = vunpack.c.l.b16 %v87
    %v510 = vunpack.c.l.b16 %v88
    %v511 = vunpack.c.h.b16 %v88
    %v512 = vunpack.c.l.b16 %v89
    %v513 = vunpack.c.l.b16 %v90
    %v514 = vunpack.c.h.b16 %v90
    %v515 = vunpack.c.l.b16 %v91
    %v516 = vunpack.c.l.b16 %v92
    %v517 = vunpack.c.h.b16 %v92
    %v518 = vunpack.c.l.b16 %v93
    %v519 = vunpack.c.l.b16 %v94
    %v520 = vunpack.c.h.b16 %v94
    %v521 = vunpack.c.l.b16 %v95
    %v522 = vunpack.c.l.b16 %v96
    %v523 = vunpack.c.h.b16 %v96
    %v524 = vunpack.c.l.b16 %v97
    %v525 = vunpack.c.l.b16 %v98
    %v526 = vunpack.c.h.b16 %v98
    %v527 = vunpack.c.l.b16 %v99
    %v528 = vunpack.c.l.b16 %v100
    %v529 = vunpack.c.h.b16 %v100
    %v530 = vunpack.c.l.b16 %v101
    %v531 = vunpack.c.l.b16 %v102
    %v532 = vunpack.c.h.b16 %v102
    %v533 = vunpack.c.l.b16 %v103
    %v534 = vunpack.c.l.b16 %v104
    %v535 = vunpack.c.h.b16 %v104
    %v536 = vunpack.c.l.b16 %v105
    %v537 = vunpack.c.l.b16 %v106
    %v538 = vunpack.c.h.b16 %v106
    %v539 = vunpack.c.l.b16 %v107
    %v540 = vunpack.c.l.b16 %v108
    %v541 = vunpack.c.h.b16 %v108
    %v542 = vunpack.c.l.b16 %v109
    %v543 = vunpack.c.l.b16 %v110
    %v544 = vunpack.c.h.b16 %v110
    %v545 = vunpack.c.l.b16 %v111
    %v546 = vunpack.c.l.b16 %v112
    %v547 = vunpack.c.h.b16 %v112
    %v548 = vunpack.c.l.b16 %v113
    %v549 = vunpack.c.l.b16 %v114
    %v550 = vunpack.c.h.b16 %v114
    %v551 = vunpack.c.l.b16 %v115
    %v552 = vunpack.c.l.b16 %v116
    %v553 = vunpack.c.h.b16 %v116
    %v554 = vunpack.c.l.b16 %v117
    %v555 = vunpack.c.l.b16 %v118
    %v556 = vunpack.c.h.b16 %v118
    %v557 = vunpack.c.l.b16 %v119
    %v558 = vunpack.c.l.b16 %v120
    %v559 = vunpack.c.h.b16 %v120
    %v560 = vunpack.c.l.b16 %v121
    %v561 = vunpack.c.l.b16 %v122
    %v562 = vunpack.c.h.b16 %v122
    %v563 = vunpack.c.l.b16 %v123
    %v564 = vunpack.c.l.b16 %v124
    %v565 = vunpack.c.h.b16 %v124
    %v566 = vunpack.c.l.b16 %v125
    %v567 = vunpack.c.l.b16 %v126
    %v568 = vunpack.c.h.b16 %v126
    %v569 = vunpack.c.l.b16 %v127
    %v570 = vunpack.c.l.b16 %v128
    %v571 = vunpack.c.h.b16 %v128
    %v572 = vunpack.c.l.b16 %v129
    %v573 = vunpack.c.l.b16 %v130
    %v574 = vunpack.c.h.b16 %v130
    %v575 = vunpack.c.l.b16 %v131
    %v576 = vunpack.c.l.b16 %v132
    %v577 = vunpack.c.h.b16 %v132
    %v578 = vunpack.c.l.b16 %v133
    %v579 = vunpack.c.l.b16 %v134
    %v580 = vunpack.c.h.b16 %v134
    %v581 = vunpack.c.l.b16 %v135
    %v582 = vunpack.c.l.b16 %v136
    %v583 = vunpack.c.h.b16 %v136
    %v584 = vunpack.c.l.b16 %v137
    %v585 = vunpack.c.l.b16 %v138
    %v586 = vunpack.c.h.b16 %v138
    %v587 = vunpack.c.l.b16 %v139
    %v588 = vunpack.c.l.b16 %v140
    %v589 = vunpack.c.h.b16 %v140
    %v590 = vunpack.c.l.b16 %v141
    %v591 = vunpack.c.l.b16 %v142
    %v592 = vunpack.c.h.b16 %v142
    %v593 = vunpack.c.l.b16 %v143
    %v594 = vunpack.c.l.b16 %v144
    %v595 = vunpack.c.h.b16 %v144
    %v596 = vunpack.c.l.b16 %v145
    %v597 = vunpack.c.l.b16 %v146
    %v598 = vunpack.c.h.b16 %v146
    %v599 = vunpack.c.l.b16 %v147
    %v600 = vunpack.c.l.b16 %v148
    %v601 = vunpack.c.h.b16 %v148
    %v602 = vunpack.c.l.b16 %v149
    %v603 = vunpack.c.l.b16 %v150
    %v604 = vunpack.c.h.b16 %v150
    %v605 = vunpack.c.l.b16 %v151
    %v606 = vunpack.c.l.b16 %v152
    %v607 = vunpack.c.h.b16 %v152
    %v608 = vunpack.c.l.b16 %v153
    %v609 = vunpack.c.l.b16 %v154
    %v610 = vunpack.c.h.b16 %v154
    %v611 = vunpack.c.l.b16 %v155
    %v612 = vunpack.c.l.b16 %v156
    %v613 = vunpack.c.h.b16 %v156
    %v614 = vunpack.c.l.b16 %v157
    %v615 = vunpack.c.l.b16 %v158
    %v616 = vunpack.c.h.b16 %v158
    %v617 = vunpack.c.l.b16 %v159
    %v618 = vunpack.c.l.b16 %v160
    %v619 = vunpack.c.h.b16 %v160
    %v620 = vunpack.c.l.b16 %v161
    %v621 = vunpack.c.l.b16 %v162
    %v622 = vunpack.c.h.b16 %v162
    %v623 = vunpack.c.l.b16 %v163
    %v624 = vunpack.c.l.b16 %v164
    %v625 = vunpack.c.h.b16 %v164
    %v626 = vunpack.c.l.b16 %v165
    %v627 = vunpack.c.l.b16 %v166
    %v628 = vunpack.c.h.b16 %v166
    %v629 = vunpack.c.l.b16 %v167
    %v630 = vunpack.c.l.b16 %v168
    %v631 = vunpack.c.h.b16 %v168
    %v632 = vunpack.c.l.b16 %v169
    %v633 = vunpack.c.l.b16 %v170
    %v634 = vunpack.c.h.b16 %v170
    %v635 = vunpack.c.l.b16 %v171
    %v636 = vunpack.c.l.b16 %v172
    %v637 = vunpack.c.h.b16 %v172
    %v638 = vunpack.c.l.b16 %v173
    %v639 = vunpack.c.l.b16 %v174
    %v640 = vunpack.c.h.b16 %v174
    %v641 = vunpack.c.l.b16 %v175
    %v642 = vunpack.c.l.b16 %v176
    %v643 = vunpack.c.h.b16 %v176
    %v644 = vunpack.c.l.b16 %v177
    %v645 = vunpack.c.l.b16 %v178
    %v646 = vunpack.c.h.b16 %v178
    %v647 = vunpack.c.l.b16 %v179
    %v648 = vunpack.c.l.b16 %v180
    %v649 = vunpack.c.h.b16 %v180
    %v650 = vunpack.c.l.b16 %v181
    %v651 = vunpack.c.l.b16 %v182
    %v652 = vunpack.c.h.b16 %v182
    %v653 = vunpack.c.l.b16 %v183
    %v654 = vunpack.c.l.b16 %v184
    %v655 = vunpack.c.h.b16 %v184
    %v656 = vunpack.c.l.b16 %v185
    %v657 = vunpack.c.l.b16 %v186
    %v658 = vunpack.c.h.b16 %v186
    %v659 = vunpack.c.l.b16 %v187
    %v660 = vunpack.c.l.b16 %v188
    %v661 = vunpack.c.h.b16 %v188
    %v662 = vunpack.c.l.b16 %v189
    %v663 = vunpack.c.l.b16 %v190
    %v664 = vunpack.c.h.b16 %v190
    %v665 = vunpack.c.l.b16 %v191
    %v666 = vunpack.c.l.b16 %v192
    %v667 = vunpack.c.h.b16 %v192
    %v668 = vunpack.c.l.b16 %v193
    %v669 = vunpack.c.l.b16 %v194
    %v670 = vunpack.c.h.b16 %v194
    %v671 = vunpack.c.l.b16 %v195
    %v672 = vunpack.c.l.b16 %v196
    %v673 = vunpack.c.h.b16 %v196
    %v674 = vunpack.c.l.b16 %v197
    %v675 = vunpack.c.l.b16 %v198
    %v676 = vunpack.c.h.b16 %v198
    %v677 = vunpack.c.l.b16 %v199
    %v678 = vunpack.c.l.b16 %v200
    %v679 = vunpack.c.h.b16 %v200
    %v680 = vunpack.c.l.b16 %v201
    %v681 = vunpack.c.l.b16 %v202
    %v682 = vunpack.c.h.b16 %v202
    %v683 = vunpack.c.l.b16 %v203
    %v684 = vunpack.c.l.b16 %v204
    %v685 = vunpack.c.h.b16 %v204
    %v686 = vunpack.c.l.b16 %v205
    %v687 = vunpack.c.l.b16 %v206
    %v688 = vunpack.c.h.b16 %v206
    %v689 = vunpack.c.l.b16 %v207
    %v690 = vunpack.c.l.b16 %v208
    %v691 = vunpack.c.h.b16 %v208
    %v692 = vunpack.c.l.b16 %v209
    %v693 = vunpack.c.l.b16 %v210
    %v694 = vunpack.c.h.b16 %v210
    %v695 = vunpack.c.l.b16 %v211
    %v696 = vunpack.c.l.b16 %v212
    %v697 = vunpack.c.h.b16 %v212
    %v698 = vunpack.c.l.b16 %v213
    %v699 = vunpack.c.l.b16 %v214
    %v700 = vunpack.c.h.b16 %v214
    %v701 = vunpack.c.l.b16 %v215
    %v702 = vunpack.c.l.b16 %v216
    %v703 = vunpack.c.h.b16 %v216
    %v704 = vunpack.c.l.b16 %v217
    %v705 = vunpack.c.l.b16 %v218
    %v706 = vunpack.c.h.b16 %v218
    %v707 = vunpack.c.l.b16 %v219
    %v708 = vunpack.c.l.b16 %v220
    %v709 = vunpack.c.h.b16 %v220
    %v710 = vunpack.c.l.b16 %v221
    %v711 = vunpack.c.l.b16 %v222
    %v712 = vunpack.c.h.b16 %v222
    %v713 = vunpack.c.l.b16 %v223
    %v714 = vunpack.c.l.b16 %v224
    %v715 = vunpack.c.h.b16 %v224
    %v716 = vunpack.c.l.b16 %v225
    %v717 = vunpack.c.l.b16 %v226
    %v718 = vunpack.c.h.b16 %v226
    %v719 = vunpack.c.l.b16 %v227
    %v720 = vunpack.c.l.b16 %v228
    %v721 = vunpack.c.h.b16 %v228
    %v722 = vunpack.c.l.b16 %v229
    %v723 = vunpack.c.l.b16 %v230
    %v724 = vunpack.c.h.b16 %v230
    %v725 = vunpack.c.l.b16 %v231
    %v726 = vunpack.c.l.b16 %v232
    %v727 = vunpack.c.h.b16 %v232
    %v728 = vunpack.c.l.b16 %v233
    %v729 = vunpack.c.l.b16 %v234
    %v730 = vunpack.c.h.b16 %v234
    %v731 = vunpack.c.l.b16 %v235
    %v732 = vunpack.c.l.b16 %v236
    %v733 = vunpack.c.h.b16 %v236
    %v734 = vunpack.c.l.b16 %v237
    %v735 = vunpack.c.l.b16 %v238
    %v736 = vunpack.c.h.b16 %v238
    %v737 = vunpack.c.l.b16 %v239
    %v738 = vunpack.c.l.b16 %v240
    %v739 = vunpack.c.h.b16 %v240
    %v740 = vunpack.c.l.b16 %v241
    %v741 = vunpack.c.l.b16 %v242
    %v742 = vunpack.c.h.b16 %v242
    %v743 = vunpack.c.l.b16 %v243
    %v744 = vunpack.c.l.b16 %v244
    %v745 = vunpack.c.h.b16 %v244
    %v746 = vunpack.c.l.b16 %v245
    %v747 = vunpack.c.l.b16 %v246
    %v748 = vunpack.c.h.b16 %v246
    %v749 = vunpack.c.l.b16 %v247
    %v750 = vunpack.c.l.b16 %v248
    %v751 = vunpack.c.h.b16 %v248
    %v752 = vunpack.c.l.b16 %v249
    %v753 = vunpack.c.l.b16 %v250
    %v754 = vunpack.c.h.b16 %v250
    %v755 = vunpack.c.l.b16 %v251
    %v756 = vunpack.c.l.b16 %v252
    %v757 = vunpack.c.h.b16 %v252
    %v758 = vunpack.c.l.b16 %v253
    %v759 = vunpack.c.l.b16 %v254
    %v760 = vunpack.c.h.b16 %v254
    %v761 = vunpack.c.l.b16 %v255
    %v762 = vunpack.c.l.b16 %v256
    %v763 = vunpack.c.h.b16 %v256
    %v764 = vunpack.c.l.b16 %v257
    %v765 = vpack.c.b16 %v474, %v471
    %v766 = vpack.c.b16 %v475, %v472
    %v767 = vpack.c.b16 %v476, %v473
    %v768 = vpack.c.b16 %v480, %v477
    %v769 = vpack.c.b16 %v481, %v478
    %v770 = vpack.c.b16 %v482, %v479
    %v771 = vpack.c.b16 %v486, %v483
    %v772 = vpack.c.b16 %v487, %v484
    %v773 = vpack.c.b16 %v488, %v485
    %v774 = vpack.c.b16 %v492, %v489
    %v775 = vpack.c.b16 %v493, %v490
    %v776 = vpack.c.b16 %v494, %v491
    %v777 = vpack.c.b16 %v498, %v495
    %v778 = vpack.c.b16 %v499, %v496
    %v779 = vpack.c.b16 %v500, %v497
    %v780 = vpack.c.b16 %v504, %v501
    %v781 = vpack.c.b16 %v505, %v502
    %v782 = vpack.c.b16 %v506, %v503
    %v783 = vpack.c.b16 %v510, %v507
    %v784 = vpack.c.b16 %v511, %v508
    %v785 = vpack.c.b16 %v512, %v509
    %v786 = vpack.c.b16 %v516, %v513
    %v787 = vpack.c.b16 %v517, %v514
    %v788 = vpack.c.b16 %v518, %v515
    %v789 = vpack.c.b16 %v522, %v519
    %v790 = vpack.c.b16 %v523, %v520
    %v791 = vpack.c.b16 %v524, %v521
    %v792 = vpack.c.b16 %v528, %v525
    %v793 = vpack.c.b16 %v529, %v526
    %v794 = vpack.c.b16 %v530, %v527
    %v795 = vpack.c.b16 %v534, %v531
    %v796 = vpack.c.b16 %v535, %v532
    %v797 = vpack.c.b16 %v536, %v533
    %v798 = vpack.c.b16 %v540, %v537
    %v799 = vpack.c.b16 %v541, %v538
    %v800 = vpack.c.b16 %v542, %v539
    %v801 = vpack.c.b16 %v546, %v543
    %v802 = vpack.c.b16 %v547, %v544
    %v803 = vpack.c.b16 %v548, %v545
    %v804 = vpack.c.b16 %v552, %v549
    %v805 = vpack.c.b16 %v553, %v550
    %v806 = vpack.c.b16 %v554, %v551
    %v807 = vpack.c.b16 %v558, %v555
    %v808 = vpack.c.b16 %v559, %v556
    %v809 = vpack.c.b16 %v560, %v557
    %v810 = vpack.c.b16 %v564, %v561
    %v811 = vpack.c.b16 %v565, %v562
    %v812 = vpack.c.b16 %v566, %v563
    %v813 = vpack.c.b16 %v570, %v567
    %v814 = vpack.c.b16 %v571, %v568
    %v815 = vpack.c.b16 %v572, %v569
    %v816 = vpack.c.b16 %v576, %v573
    %v817 = vpack.c.b16 %v577, %v574
    %v818 = vpack.c.b16 %v578, %v575
    %v819 = vpack.c.b16 %v582, %v579
    %v820 = vpack.c.b16 %v583, %v580
    %v821 = vpack.c.b16 %v584, %v581
    %v822 = vpack.c.b16 %v588, %v585
    %v823 = vpack.c.b16 %v589, %v586
    %v824 = vpack.c.b16 %v590, %v587
    %v825 = vpack.c.b16 %v594, %v591
    %v826 = vpack.c.b16 %v595, %v592
    %v827 = vpack.c.b16 %v596, %v593
    %v828 = vpack.c.b16 %v600, %v597
    %v829 = vpack.c.b16 %v601, %v598
    %v830 = vpack.c.b16 %v602, %v599
    %v831 = vpack.c.b16 %v606, %v603
    %v832 = vpack.c.b16 %v607, %v604
    %v833 = vpack.c.b16 %v608, %v605
    %v834 = vpack.c.b16 %v612, %v609
    %v835 = vpack.c.b16 %v613, %v610
    %v836 = vpack.c.b16 %v614, %v611
    %v837 = vpack.c.b16 %v618, %v615
    %v838 = vpack.c.b16 %v619, %v616
    %v839 = vpack.c.b16 %v620, %v617
    %v840 = vpack.c.b16 %v624, %v621
    %v841 = vpack.c.b16 %v625, %v622
    %v842 = vpack.c.b16 %v626, %v623
    %v843 = vpack.c.b16 %v630, %v627
    %v844 = vpack.c.b16 %v631, %v628
    %v845 = vpack.c.b16 %v632, %v629
    %v846 = vpack.c.b16 %v636, %v633
    %v847 = vpack.c.b16 %v637, %v634
    %v848 = vpack.c.b16 %v638, %v635
    %v849 = vpack.c.b16 %v642, %v639
    %v850 = vpack.c.b16 %v643, %v640
    %v851 = vpack.c.b16 %v644, %v641
    %v852 = vpack.c.b16 %v648, %v645
    %v853 = vpack.c.b16 %v649, %v646
    %v854 = vpack.c.b16 %v650, %v647
    %v855 = vpack.c.b16 %v654, %v651
    %v856 = vpack.c.b16 %v655, %v652
    %v857 = vpack.c.b16 %v656, %v653
    %v858 = vpack.c.b16 %v660, %v657
    %v859 = vpack.c.b16 %v661, %v658
    %v860 = vpack.c.b16 %v662, %v659
    %v861 = vpack.c.b16 %v666, %v663
    %v862 = vpack.c.b16 %v667, %v664
    %v863 = vpack.c.b16 %v668, %v665
    %v864 = vpack.c.b16 %v672, %v669
    %v865 = vpack.c.b16 %v673, %v670
    %v866 = vpack.c.b16 %v674, %v671
    %v867 = vpack.c.b16 %v678, %v675
    %v868 = vpack.c.b16 %v679, %v676
    %v869 = vpack.c.b16 %v680, %v677
    %v870 = vpack.c.b16 %v684, %v681
    %v871 = vpack.c.b16 %v685, %v682
    %v872 = vpack.c.b16 %v686, %v683
    %v873 = vpack.c.b16 %v690, %v687
    %v874 = vpack.c.b16 %v691, %v688
    %v875 = vpack.c.b16 %v692, %v689
    %v876 = vpack.c.b16 %v696, %v693
    %v877 = vpack.c.b16 %v697, %v694
    %v878 = vpack.c.b16 %v698, %v695
    %v879 = vpack.c.b16 %v702, %v699
    %v880 = vpack.c.b16 %v703, %v700
    %v881 = vpack.c.b16 %v704, %v701
    %v882 = vpack.c.b16 %v708, %v705
    %v883 = vpack.c.b16 %v709, %v706
    %v884 = vpack.c.b16 %v710, %v707
    %v885 = vpack.c.b16 %v714, %v711
    %v886 = vpack.c.b16 %v715, %v712
    %v887 = vpack.c.b16 %v716, %v713
    %v888 = vpack.c.b16 %v720, %v717
    %v889 = vpack.c.b16 %v721, %v718
    %v890 = vpack.c.b16 %v722, %v719
    %v891 = vpack.c.b16 %v726, %v723
    %v892 = vpack.c.b16 %v727, %v724
    %v893 = vpack.c.b16 %v728, %v725
    %v894 = vpack.c.b16 %v732, %v729
    %v895 = vpack.c.b16 %v733, %v730
    %v896 = vpack.c.b16 %v734, %v731
    %v897 = vpack.c.b16 %v738, %v735
    %v898 = vpack.c.b16 %v739, %v736
    %v899 = vpack.c.b16 %v740, %v737
    %v900 = vpack.c.b16 %v744, %v741
    %v901 = vpack.c.b16 %v745, %v742
    %v902 = vpack.c.b16 %v746, %v743
    %v903 = vpack.c.b16 %v750, %v747
    %v904 = vpack.c.b16 %v751, %v748
    %v905 = vpack.c.b16 %v752, %v749
    %v906 = vpack.c.b16 %v756, %v753
    %v907 = vpack.c.b16 %v757, %v754
    %v908 = vpack.c.b16 %v758, %v755
    %v909 = vpack.c.b16 %v762, %v759
    %v910 = vpack.c.b16 %v763, %v760
    %v911 = vpack.c.b16 %v764, %v761
    %vm1059 = vcmask 130048
    %v1061 = vsel %vm1059, %v61, 0
    %1063 = vmatprep.subr.bf16.mxu0 %v766
    %1064 = vmatpush1.bf16.msra.mxu0 %v765
    %1065 = vmatprep.subr.bf16.mxu0 %v769
    %1066 = vmatpush1.bf16.msra.mxu0 %v768
    %1067 = vmatprep.subr.bf16.mxu0 %v772
    %1068 = vmatpush1.bf16.msra.mxu0 %v771
    %1069 = vmatprep.subr.bf16.mxu0 %v775
    %1070 = vmatpush1.bf16.msra.mxu0 %v774
    %1071 = vmatprep.subr.bf16.mxu0 %v778
    %1072 = vmatpush1.bf16.msra.mxu0 %v777
    %1073 = vmatprep.subr.bf16.mxu0 %v781
    %1074 = vmatpush1.bf16.msra.mxu0 %v780
    %1075 = vmatprep.subr.bf16.mxu0 %v784
    %1076 = vmatpush1.bf16.msra.mxu0 %v783
    %1077 = vmatprep.subr.bf16.mxu0 %v787
    %1078 = vmatpush1.bf16.msra.mxu0 %v786
    %1079 = vmatprep.subr.bf16.mxu0 %v790
    %1080 = vmatpush1.bf16.msra.mxu0 %v789
    %1081 = vmatprep.subr.bf16.mxu0 %v793
    %1082 = vmatpush1.bf16.msra.mxu0 %v792
    %1083 = vmatprep.subr.bf16.mxu0 %v796
    %1084 = vmatpush1.bf16.msra.mxu0 %v795
    %1085 = vmatprep.subr.bf16.mxu0 %v799
    %1086 = vmatpush1.bf16.msra.mxu0 %v798
    %1087 = vmatprep.subr.bf16.mxu0 %v802
    %1088 = vmatpush1.bf16.msra.mxu0 %v801
    %1089 = vmatprep.subr.bf16.mxu0 %v805
    %1090 = vmatpush1.bf16.msra.mxu0 %v804
    %1091 = vmatprep.subr.bf16.mxu0 %v808
    %1092 = vmatpush1.bf16.msra.mxu0 %v807
    %1093 = vmatprep.subr.bf16.mxu0 %v811
    %1094 = vmatpush1.bf16.msra.mxu0 %v810
    %1095 = vmatprep.mubr.bf16.mxu0 %v56
    %1096 = vmatmul.mubr.bf16.gmra.mrb[0].mxu0 %v55
    %v1097 = vpop.f32.mrb[0].mxu0
    %v1098 = vadd.f32 %v263, %v1097
    %v1099 = vpop.f32.mrb[0].mxu0
    %v1100 = vadd.f32 %v267, %v1099
    %v1101 = vpop.f32.mrb[0].mxu0
    %v1102 = vadd.f32 %v263, %v1101
    %v1103 = vpop.f32.mrb[0].mxu0
    %v1104 = vadd.f32 %v267, %v1103
    %1105 = vdwg.mxu0
    %1106 = vmatprep.subr.bf16.mxu0 %v814
    %1107 = vmatpush1.bf16.msra.mxu0 %v813
    %1108 = vmatprep.subr.bf16.mxu0 %v817
    %1109 = vmatpush1.bf16.msra.mxu0 %v816
    %1110 = vmatprep.subr.bf16.mxu0 %v820
    %1111 = vmatpush1.bf16.msra.mxu0 %v819
    %1112 = vmatprep.subr.bf16.mxu0 %v823
    %1113 = vmatpush1.bf16.msra.mxu0 %v822
    %1114 = vmatprep.subr.bf16.mxu0 %v826
    %1115 = vmatpush1.bf16.msra.mxu0 %v825
    %1116 = vmatprep.subr.bf16.mxu0 %v829
    %1117 = vmatpush1.bf16.msra.mxu0 %v828
    %1118 = vmatprep.subr.bf16.mxu0 %v832
    %1119 = vmatpush1.bf16.msra.mxu0 %v831
    %1120 = vmatprep.subr.bf16.mxu0 %v835
    %1121 = vmatpush1.bf16.msra.mxu0 %v834
    %1122 = vmatprep.subr.bf16.mxu0 %v838
    %1123 = vmatpush1.bf16.msra.mxu0 %v837
    %1124 = vmatprep.subr.bf16.mxu0 %v841
    %1125 = vmatpush1.bf16.msra.mxu0 %v840
    %1126 = vmatprep.subr.bf16.mxu0 %v844
    %1127 = vmatpush1.bf16.msra.mxu0 %v843
    %1128 = vmatprep.subr.bf16.mxu0 %v847
    %1129 = vmatpush1.bf16.msra.mxu0 %v846
    %1130 = vmatprep.subr.bf16.mxu0 %v850
    %1131 = vmatpush1.bf16.msra.mxu0 %v849
    %1132 = vmatprep.subr.bf16.mxu0 %v853
    %1133 = vmatpush1.bf16.msra.mxu0 %v852
    %1134 = vmatprep.subr.bf16.mxu0 %v856
    %1135 = vmatpush1.bf16.msra.mxu0 %v855
    %1136 = vmatprep.subr.bf16.mxu0 %v859
    %1137 = vmatpush1.bf16.msra.mxu0 %v858
    %1138 = vmatprep.mubr.bf16.mxu0 %v58
    %1139 = vmatmul.mubr.bf16.gmra.mrb[0].mxu0 %v57
    %v1140 = vpop.f32.mrb[0].mxu0
    %v1141 = vadd.f32 %v1098, %v1140
    %v1142 = vpop.f32.mrb[0].mxu0
    %v1143 = vadd.f32 %v1100, %v1142
    %v1144 = vpop.f32.mrb[0].mxu0
    %v1145 = vadd.f32 %v1102, %v1144
    %v1146 = vpop.f32.mrb[0].mxu0
    %v1147 = vadd.f32 %v1104, %v1146
    %1148 = vdwg.mxu0
    %1149 = vmatprep.subr.bf16.mxu0 %v862
    %1150 = vmatpush1.bf16.msra.mxu0 %v861
    %1151 = vmatprep.subr.bf16.mxu0 %v865
    %1152 = vmatpush1.bf16.msra.mxu0 %v864
    %1153 = vmatprep.subr.bf16.mxu0 %v868
    %1154 = vmatpush1.bf16.msra.mxu0 %v867
    %1155 = vmatprep.subr.bf16.mxu0 %v871
    %1156 = vmatpush1.bf16.msra.mxu0 %v870
    %1157 = vmatprep.subr.bf16.mxu0 %v874
    %1158 = vmatpush1.bf16.msra.mxu0 %v873
    %1159 = vmatprep.subr.bf16.mxu0 %v877
    %1160 = vmatpush1.bf16.msra.mxu0 %v876
    %1161 = vmatprep.subr.bf16.mxu0 %v880
    %1162 = vmatpush1.bf16.msra.mxu0 %v879
    %1163 = vmatprep.subr.bf16.mxu0 %v883
    %1164 = vmatpush1.bf16.msra.mxu0 %v882
    %1165 = vmatprep.subr.bf16.mxu0 %v886
    %1166 = vmatpush1.bf16.msra.mxu0 %v885
    %1167 = vmatprep.subr.bf16.mxu0 %v889
    %1168 = vmatpush1.bf16.msra.mxu0 %v888
    %1169 = vmatprep.subr.bf16.mxu0 %v892
    %1170 = vmatpush1.bf16.msra.mxu0 %v891
    %1171 = vmatprep.subr.bf16.mxu0 %v895
    %1172 = vmatpush1.bf16.msra.mxu0 %v894
    %1173 = vmatprep.subr.bf16.mxu0 %v898
    %1174 = vmatpush1.bf16.msra.mxu0 %v897
    %1175 = vmatprep.subr.bf16.mxu0 %v901
    %1176 = vmatpush1.bf16.msra.mxu0 %v900
    %1177 = vmatprep.subr.bf16.mxu0 %v904
    %1178 = vmatpush1.bf16.msra.mxu0 %v903
    %1179 = vmatprep.subr.bf16.mxu0 %v907
    %1180 = vmatpush1.bf16.msra.mxu0 %v906
    %1181 = vmatprep.mubr.bf16.mxu0 %v60
    %1182 = vmatmul.mubr.bf16.gmra.mrb[0].mxu0 %v59
    %v1183 = vpop.f32.mrb[0].mxu0
    %v1184 = vadd.f32 %v1141, %v1183
    %v1185 = vpop.f32.mrb[0].mxu0
    %v1186 = vadd.f32 %v1143, %v1185
    %v1187 = vpop.f32.mrb[0].mxu0
    %v1188 = vadd.f32 %v1145, %v1187
    %v1189 = vpop.f32.mrb[0].mxu0
    %v1190 = vadd.f32 %v1147, %v1189
    %1191 = vdwg.mxu0
    %1192 = vmatprep.subr.bf16.mxu0 %v910
    %1193 = vmatpush1.bf16.msra.mxu0 %v909
    %1194 = vmatprep.subr.bf16.mxu0 0
    %1195 = vmatpush1.bf16.msra.mxu0 0
    %1196 = vmatprep.subr.bf16.mxu0 0
    %1197 = vmatpush1.bf16.msra.mxu0 0
    %1198 = vmatprep.subr.bf16.mxu0 0
    %1199 = vmatpush1.bf16.msra.mxu0 0
    %1200 = vmatprep.subr.bf16.mxu0 0
    %1201 = vmatpush1.bf16.msra.mxu0 0
    %1202 = vmatprep.subr.bf16.mxu0 0
    %1203 = vmatpush1.bf16.msra.mxu0 0
    %1204 = vmatprep.subr.bf16.mxu0 0
    %1205 = vmatpush1.bf16.msra.mxu0 0
    %1206 = vmatprep.subr.bf16.mxu0 0
    %1207 = vmatpush1.bf16.msra.mxu0 0
    %1208 = vmatprep.subr.bf16.mxu0 0
    %1209 = vmatpush1.bf16.msra.mxu0 0
    %1210 = vmatprep.subr.bf16.mxu0 0
    %1211 = vmatpush1.bf16.msra.mxu0 0
    %1212 = vmatprep.subr.bf16.mxu0 0
    %1213 = vmatpush1.bf16.msra.mxu0 0
    %1214 = vmatprep.subr.bf16.mxu0 0
    %1215 = vmatpush1.bf16.msra.mxu0 0
    %1216 = vmatprep.subr.bf16.mxu0 0
    %1217 = vmatpush1.bf16.msra.mxu0 0
    %1218 = vmatprep.subr.bf16.mxu0 0
    %1219 = vmatpush1.bf16.msra.mxu0 0
    %1220 = vmatprep.subr.bf16.mxu0 0
    %1221 = vmatpush1.bf16.msra.mxu0 0
    %1222 = vmatprep.subr.bf16.mxu0 0
    %1223 = vmatpush1.bf16.msra.mxu0 0
    %1224 = vmatprep.mubr.bf16.mxu0 0
    %1225 = vmatmul.mubr.bf16.gmra.mrb[0].mxu0 %v1061
    %v1226 = vpop.f32.mrb[0].mxu0
    %v1227 = vadd.f32 %v1184, %v1226
    %v1228 = vpop.f32.mrb[0].mxu0
    %v1229 = vadd.f32 %v1186, %v1228
    %v1230 = vpop.f32.mrb[0].mxu0
    %v1231 = vadd.f32 %v1188, %v1230
    %v1232 = vpop.f32.mrb[0].mxu0
    %v1233 = vadd.f32 %v1190, %v1232
    %1234 = vdwg.mxu0
    %1235 = vmatprep.subr.bf16.mxu0 0
    %1236 = vmatpush1.bf16.msra.mxu0 %v767
    %1237 = vmatprep.subr.bf16.mxu0 0
    %1238 = vmatpush1.bf16.msra.mxu0 %v770
    %1239 = vmatprep.subr.bf16.mxu0 0
    %1240 = vmatpush1.bf16.msra.mxu0 %v773
    %1241 = vmatprep.subr.bf16.mxu0 0
    %1242 = vmatpush1.bf16.msra.mxu0 %v776
    %1243 = vmatprep.subr.bf16.mxu0 0
    %1244 = vmatpush1.bf16.msra.mxu0 %v779
    %1245 = vmatprep.subr.bf16.mxu0 0
    %1246 = vmatpush1.bf16.msra.mxu0 %v782
    %1247 = vmatprep.subr.bf16.mxu0 0
    %1248 = vmatpush1.bf16.msra.mxu0 %v785
    %1249 = vmatprep.subr.bf16.mxu0 0
    %1250 = vmatpush1.bf16.msra.mxu0 %v788
    %1251 = vmatprep.subr.bf16.mxu0 0
    %1252 = vmatpush1.bf16.msra.mxu0 %v791
    %1253 = vmatprep.subr.bf16.mxu0 0
    %1254 = vmatpush1.bf16.msra.mxu0 %v794
    %1255 = vmatprep.subr.bf16.mxu0 0
    %1256 = vmatpush1.bf16.msra.mxu0 %v797
    %1257 = vmatprep.subr.bf16.mxu0 0
    %1258 = vmatpush1.bf16.msra.mxu0 %v800
    %1259 = vmatprep.subr.bf16.mxu0 0
    %1260 = vmatpush1.bf16.msra.mxu0 %v803
    %1261 = vmatprep.subr.bf16.mxu0 0
    %1262 = vmatpush1.bf16.msra.mxu0 %v806
    %1263 = vmatprep.subr.bf16.mxu0 0
    %1264 = vmatpush1.bf16.msra.mxu0 %v809
    %1265 = vmatprep.subr.bf16.mxu0 0
    %1266 = vmatpush1.bf16.msra.mxu0 %v812
    %1267 = vmatprep.mubr.bf16.mxu0 %v56
    %1268 = vmatmul.mubr.bf16.gmra.mrb[0].mxu0 %v55
    %v1269 = vpop.f32.mrb[0].mxu0
    %v1270 = vadd.f32 %v271, %v1269
    %v1271 = vpop.f32.mrb[0].mxu0
    %v1272 = vpop.f32.mrb[0].mxu0
    %v1273 = vadd.f32 %v271, %v1272
    %v1274 = vpop.f32.mrb[0].mxu0
    %1275 = vdwg.mxu0
    %1276 = vmatprep.subr.bf16.mxu0 0
    %1277 = vmatpush1.bf16.msra.mxu0 %v815
    %1278 = vmatprep.subr.bf16.mxu0 0
    %1279 = vmatpush1.bf16.msra.mxu0 %v818
    %1280 = vmatprep.subr.bf16.mxu0 0
    %1281 = vmatpush1.bf16.msra.mxu0 %v821
    %1282 = vmatprep.subr.bf16.mxu0 0
    %1283 = vmatpush1.bf16.msra.mxu0 %v824
    %1284 = vmatprep.subr.bf16.mxu0 0
    %1285 = vmatpush1.bf16.msra.mxu0 %v827
    %1286 = vmatprep.subr.bf16.mxu0 0
    %1287 = vmatpush1.bf16.msra.mxu0 %v830
    %1288 = vmatprep.subr.bf16.mxu0 0
    %1289 = vmatpush1.bf16.msra.mxu0 %v833
    %1290 = vmatprep.subr.bf16.mxu0 0
    %1291 = vmatpush1.bf16.msra.mxu0 %v836
    %1292 = vmatprep.subr.bf16.mxu0 0
    %1293 = vmatpush1.bf16.msra.mxu0 %v839
    %1294 = vmatprep.subr.bf16.mxu0 0
    %1295 = vmatpush1.bf16.msra.mxu0 %v842
    %1296 = vmatprep.subr.bf16.mxu0 0
    %1297 = vmatpush1.bf16.msra.mxu0 %v845
    %1298 = vmatprep.subr.bf16.mxu0 0
    %1299 = vmatpush1.bf16.msra.mxu0 %v848
    %1300 = vmatprep.subr.bf16.mxu0 0
    %1301 = vmatpush1.bf16.msra.mxu0 %v851
    %1302 = vmatprep.subr.bf16.mxu0 0
    %1303 = vmatpush1.bf16.msra.mxu0 %v854
    %1304 = vmatprep.subr.bf16.mxu0 0
    %1305 = vmatpush1.bf16.msra.mxu0 %v857
    %1306 = vmatprep.subr.bf16.mxu0 0
    %1307 = vmatpush1.bf16.msra.mxu0 %v860
    %1308 = vmatprep.mubr.bf16.mxu0 %v58
    %1309 = vmatmul.mubr.bf16.gmra.mrb[0].mxu0 %v57
    %v1310 = vpop.f32.mrb[0].mxu0
    %v1311 = vadd.f32 %v1270, %v1310
    %v1312 = vpop.f32.mrb[0].mxu0
    %v1313 = vpop.f32.mrb[0].mxu0
    %v1314 = vadd.f32 %v1273, %v1313
    %v1315 = vpop.f32.mrb[0].mxu0
    %1316 = vdwg.mxu0
    %1317 = vmatprep.subr.bf16.mxu0 0
    %1318 = vmatpush1.bf16.msra.mxu0 %v863
    %1319 = vmatprep.subr.bf16.mxu0 0
    %1320 = vmatpush1.bf16.msra.mxu0 %v866
    %1321 = vmatprep.subr.bf16.mxu0 0
    %1322 = vmatpush1.bf16.msra.mxu0 %v869
    %1323 = vmatprep.subr.bf16.mxu0 0
    %1324 = vmatpush1.bf16.msra.mxu0 %v872
    %1325 = vmatprep.subr.bf16.mxu0 0
    %1326 = vmatpush1.bf16.msra.mxu0 %v875
    %1327 = vmatprep.subr.bf16.mxu0 0
    %1328 = vmatpush1.bf16.msra.mxu0 %v878
    %1329 = vmatprep.subr.bf16.mxu0 0
    %1330 = vmatpush1.bf16.msra.mxu0 %v881
    %1331 = vmatprep.subr.bf16.mxu0 0
    %1332 = vmatpush1.bf16.msra.mxu0 %v884
    %1333 = vmatprep.subr.bf16.mxu0 0
    %1334 = vmatpush1.bf16.msra.mxu0 %v887
    %1335 = vmatprep.subr.bf16.mxu0 0
    %1336 = vmatpush1.bf16.msra.mxu0 %v890
    %1337 = vmatprep.subr.bf16.mxu0 0
    %1338 = vmatpush1.bf16.msra.mxu0 %v893
    %1339 = vmatprep.subr.bf16.mxu0 0
    %1340 = vmatpush1.bf16.msra.mxu0 %v896
    %1341 = vmatprep.subr.bf16.mxu0 0
    %1342 = vmatpush1.bf16.msra.mxu0 %v899
    %1343 = vmatprep.subr.bf16.mxu0 0
    %1344 = vmatpush1.bf16.msra.mxu0 %v902
    %1345 = vmatprep.subr.bf16.mxu0 0
    %1346 = vmatpush1.bf16.msra.mxu0 %v905
    %1347 = vmatprep.subr.bf16.mxu0 0
    %1348 = vmatpush1.bf16.msra.mxu0 %v908
    %1349 = vmatprep.mubr.bf16.mxu0 %v60
    %1350 = vmatmul.mubr.bf16.gmra.mrb[0].mxu0 %v59
    %v1351 = vpop.f32.mrb[0].mxu0
    %v1352 = vadd.f32 %v1311, %v1351
    %v1353 = vpop.f32.mrb[0].mxu0
    %v1354 = vpop.f32.mrb[0].mxu0
    %v1355 = vadd.f32 %v1314, %v1354
    %v1356 = vpop.f32.mrb[0].mxu0
    %1357 = vdwg.mxu0
    %1358 = vmatprep.subr.bf16.mxu0 0
    %1359 = vmatpush1.bf16.msra.mxu0 %v911
    %1360 = vmatprep.subr.bf16.mxu0 0
    %1361 = vmatpush1.bf16.msra.mxu0 0
    %1362 = vmatprep.subr.bf16.mxu0 0
    %1363 = vmatpush1.bf16.msra.mxu0 0
    %1364 = vmatprep.subr.bf16.mxu0 0
    %1365 = vmatpush1.bf16.msra.mxu0 0
    %1366 = vmatprep.subr.bf16.mxu0 0
    %1367 = vmatpush1.bf16.msra.mxu0 0
    %1368 = vmatprep.subr.bf16.mxu0 0
    %1369 = vmatpush1.bf16.msra.mxu0 0
    %1370 = vmatprep.subr.bf16.mxu0 0
    %1371 = vmatpush1.bf16.msra.mxu0 0
    %1372 = vmatprep.subr.bf16.mxu0 0
    %1373 = vmatpush1.bf16.msra.mxu0 0
    %1374 = vmatprep.subr.bf16.mxu0 0
    %1375 = vmatpush1.bf16.msra.mxu0 0
    %1376 = vmatprep.subr.bf16.mxu0 0
    %1377 = vmatpush1.bf16.msra.mxu0 0
    %1378 = vmatprep.subr.bf16.mxu0 0
    %1379 = vmatpush1.bf16.msra.mxu0 0
    %1380 = vmatprep.subr.bf16.mxu0 0
    %1381 = vmatpush1.bf16.msra.mxu0 0
    %1382 = vmatprep.subr.bf16.mxu0 0
    %1383 = vmatpush1.bf16.msra.mxu0 0
    %1384 = vmatprep.subr.bf16.mxu0 0
    %1385 = vmatpush1.bf16.msra.mxu0 0
    %1386 = vmatprep.subr.bf16.mxu0 0
    %1387 = vmatpush1.bf16.msra.mxu0 0
    %1388 = vmatprep.subr.bf16.mxu0 0
    %1389 = vmatpush1.bf16.msra.mxu0 0
    %1390 = vmatprep.mubr.bf16.mxu0 0
    %1391 = vmatmul.mubr.bf16.gmra.mrb[0].mxu0 %v1061
    %v1392 = vpop.f32.mrb[0].mxu0
    %v1393 = vadd.f32 %v1352, %v1392
    %v1394 = vpop.f32.mrb[0].mxu0
    %v1395 = vpop.f32.mrb[0].mxu0
    %v1396 = vadd.f32 %v1355, %v1395
    %v1397 = vpop.f32.mrb[0].mxu0
    %1398 = vdwg.mxu0
    %v1399 = vmax.f32 %v1227, 0.0
    %v1400 = vmax.f32 %v1229, 0.0
    %v1401 = vmax.f32 %v1393, 0.0
    %v1402 = vmax.f32 %v1231, 0.0
    %v1403 = vmax.f32 %v1233, 0.0
    %v1404 = vmax.f32 %v1396, 0.0
    %v1405 = vpack.c.bf16 %v1402, %v1399
    %v1406 = vpack.c.bf16 %v1403, %v1400
    %v1407 = vpack.c.bf16 %v1404, %v1401
    %v1408 = vld [vmem:[%s3] sm:$0xff]
    %v1409 = vld [vmem:[%s3 + $0x8] sm:$0xf]
    %v1410 = vld [vmem:[%s3 + $0xc] sm:$0xff]
    %v1411 = vld [vmem:[%s3 + $0x14] sm:$0xf]
    %v1412 = vld [vmem:[%s3 + $0x18] sm:$0xff]
    %v1413 = vld [vmem:[%s3 + $0x20] sm:$0xf]
    %v1414 = vld [vmem:[%s3 + $0x24] sm:$0xff]
    %v1415 = vld [vmem:[%s3 + $0x2c] sm:$0xf]
    %v1416 = vld [vmem:[%s3 + $0x30] sm:$0xff]
    %v1417 = vld [vmem:[%s3 + $0x38] sm:$0xf]
    %v1418 = vld [vmem:[%s3 + $0x3c] sm:$0xff]
    %v1419 = vld [vmem:[%s3 + $0x44] sm:$0xf]
    %v1420 = vld [vmem:[%s3 + $0x48] sm:$0xff]
    %v1421 = vld [vmem:[%s3 + $0x50] sm:$0xf]
    %v1422 = vld [vmem:[%s3 + $0x54] sm:$0xff]
    %v1423 = vld [vmem:[%s3 + $0x5c] sm:$0xf]
    %v1424 = vld [vmem:[%s3 + $0x60] sm:$0xff]
    %v1425 = vld [vmem:[%s3 + $0x68] sm:$0xf]
    %v1426 = vld [vmem:[%s3 + $0x6c] sm:$0xff]
    %v1427 = vld [vmem:[%s3 + $0x74] sm:$0xf]
    %v1428 = vld [vmem:[%s3 + $0x78] sm:$0xff]
    %v1429 = vld [vmem:[%s3 + $0x80] sm:$0xf]
    %v1430 = vld [vmem:[%s3 + $0x84] sm:$0xff]
    %v1431 = vld [vmem:[%s3 + $0x8c] sm:$0xf]
    %v1432 = vld [vmem:[%s3 + $0x90] sm:$0xff]
    %v1433 = vld [vmem:[%s3 + $0x98] sm:$0xf]
    %v1434 = vld [vmem:[%s3 + $0x9c] sm:$0xff]
    %v1435 = vld [vmem:[%s3 + $0xa4] sm:$0xf]
    %v1436 = vld [vmem:[%s3 + $0xa8] sm:$0xff]
    %v1437 = vld [vmem:[%s3 + $0xb0] sm:$0xf]
    %v1438 = vld [vmem:[%s3 + $0xb4] sm:$0xff]
    %v1439 = vld [vmem:[%s3 + $0xbc] sm:$0xf]
    %v1440 = vld [vmem:[%s3 + $0xc0] sm:$0xff]
    %v1441 = vld [vmem:[%s3 + $0xc8] sm:$0xf]
    %v1442 = vld [vmem:[%s3 + $0xcc] sm:$0xff]
    %v1443 = vld [vmem:[%s3 + $0xd4] sm:$0xf]
    %v1444 = vld [vmem:[%s3 + $0xd8] sm:$0xff]
    %v1445 = vld [vmem:[%s3 + $0xe0] sm:$0xf]
    %v1446 = vld [vmem:[%s3 + $0xe4] sm:$0xff]
    %v1447 = vld [vmem:[%s3 + $0xec] sm:$0xf]
    %v1448 = vld [vmem:[%s3 + $0xf0] sm:$0xff]
    %v1449 = vld [vmem:[%s3 + $0xf8] sm:$0xf]
    %v1450 = vld [vmem:[%s3 + $0xfc] sm:$0xff]
    %v1451 = vld [vmem:[%s3 + $0x104] sm:$0xf]
    %v1452 = vld [vmem:[%s3 + $0x108] sm:$0xff]
    %v1453 = vld [vmem:[%s3 + $0x110] sm:$0xf]
    %v1454 = vld [vmem:[%s3 + $0x114] sm:$0xff]
    %v1455 = vld [vmem:[%s3 + $0x11c] sm:$0xf]
    %v1456 = vld [vmem:[%s3 + $0x120] sm:$0xff]
    %v1457 = vld [vmem:[%s3 + $0x128] sm:$0xf]
    %v1458 = vld [vmem:[%s3 + $0x12c] sm:$0xff]
    %v1459 = vld [vmem:[%s3 + $0x134] sm:$0xf]
    %v1460 = vld [vmem:[%s3 + $0x138] sm:$0xff]
    %v1461 = vld [vmem:[%s3 + $0x140] sm:$0xf]
    %v1462 = vld [vmem:[%s3 + $0x144] sm:$0xff]
    %v1463 = vld [vmem:[%s3 + $0x14c] sm:$0xf]
    %v1464 = vld [vmem:[%s3 + $0x150] sm:$0xff]
    %v1465 = vld [vmem:[%s3 + $0x158] sm:$0xf]
    %v1466 = vld [vmem:[%s3 + $0x15c] sm:$0xff]
    %v1467 = vld [vmem:[%s3 + $0x164] sm:$0xf]
    %v1468 = vld [vmem:[%s3 + $0x168] sm:$0xff]
    %v1469 = vld [vmem:[%s3 + $0x170] sm:$0xf]
    %v1470 = vld [vmem:[%s3 + $0x174] sm:$0xff]
    %v1471 = vld [vmem:[%s3 + $0x17c] sm:$0xf]
    %v1472 = vld [vmem:[%s3 + $0x180] sm:$0xff]
    %v1473 = vld [vmem:[%s3 + $0x188] sm:$0xf]
    %v1474 = vld [vmem:[%s3 + $0x18c] sm:$0xff]
    %v1475 = vld [vmem:[%s3 + $0x194] sm:$0xf]
    %v1476 = vld [vmem:[%s3 + $0x198] sm:$0xff]
    %v1477 = vld [vmem:[%s3 + $0x1a0] sm:$0xf]
    %v1478 = vld [vmem:[%s3 + $0x1a4] sm:$0xff]
    %v1479 = vld [vmem:[%s3 + $0x1ac] sm:$0xf]
    %v1480 = vld [vmem:[%s3 + $0x1b0] sm:$0xff]
    %v1481 = vld [vmem:[%s3 + $0x1b8] sm:$0xf]
    %v1482 = vld [vmem:[%s3 + $0x1bc] sm:$0xff]
    %v1483 = vld [vmem:[%s3 + $0x1c4] sm:$0xf]
    %v1484 = vld [vmem:[%s3 + $0x1c8] sm:$0xff]
    %v1485 = vld [vmem:[%s3 + $0x1d0] sm:$0xf]
    %v1486 = vld [vmem:[%s3 + $0x1d4] sm:$0xff]
    %v1487 = vld [vmem:[%s3 + $0x1dc] sm:$0xf]
    %v1488 = vld [vmem:[%s3 + $0x1e0] sm:$0xff]
    %v1489 = vld [vmem:[%s3 + $0x1e8] sm:$0xf]
    %v1490 = vld [vmem:[%s3 + $0x1ec] sm:$0xff]
    %v1491 = vld [vmem:[%s3 + $0x1f4] sm:$0xf]
    %v1492 = vld [vmem:[%s3 + $0x1f8] sm:$0xff]
    %v1493 = vld [vmem:[%s3 + $0x200] sm:$0xf]
    %v1494 = vld [vmem:[%s3 + $0x204] sm:$0xff]
    %v1495 = vld [vmem:[%s3 + $0x20c] sm:$0xf]
    %v1496 = vld [vmem:[%s3 + $0x210] sm:$0xff]
    %v1497 = vld [vmem:[%s3 + $0x218] sm:$0xf]
    %v1498 = vld [vmem:[%s3 + $0x21c] sm:$0xff]
    %v1499 = vld [vmem:[%s3 + $0x224] sm:$0xf]
    %v1500 = vld [vmem:[%s3 + $0x228] sm:$0xff]
    %v1501 = vld [vmem:[%s3 + $0x230] sm:$0xf]
    %v1502 = vld [vmem:[%s3 + $0x234] sm:$0xff]
    %v1503 = vld [vmem:[%s3 + $0x23c] sm:$0xf]
    %v1504 = vld [vmem:[%s4] sm:$0x7]
    %v1506 = vlaneseq
    %v1507 = vshrl.u32 %v1506, 7
    %v1508 = vsub.s32 0, %v1507
    %v1509 = vrot.slane %v1504, %v1508
    %v1510 = vlaneseq
    %v1511 = vshrl.u32 %v1510, 7
    %v1512 = vsub.s32 1, %v1511
    %v1513 = vrot.slane %v1504, %v1512
    %v1514 = vlaneseq
    %v1515 = vshrl.u32 %v1514, 7
    %v1516 = vsub.s32 2, %v1515
    %v1517 = vrot.slane %v1504, %v1516
    %v1617 = vunpack.c.l.b16 %v1408
    %v1618 = vunpack.c.h.b16 %v1408
    %v1619 = vunpack.c.l.b16 %v1409
    %v1620 = vunpack.c.l.b16 %v1410
    %v1621 = vunpack.c.h.b16 %v1410
    %v1622 = vunpack.c.l.b16 %v1411
    %v1623 = vunpack.c.l.b16 %v1412
    %v1624 = vunpack.c.h.b16 %v1412
    %v1625 = vunpack.c.l.b16 %v1413
    %v1626 = vunpack.c.l.b16 %v1414
    %v1627 = vunpack.c.h.b16 %v1414
    %v1628 = vunpack.c.l.b16 %v1415
    %v1629 = vunpack.c.l.b16 %v1416
    %v1630 = vunpack.c.h.b16 %v1416
    %v1631 = vunpack.c.l.b16 %v1417
    %v1632 = vunpack.c.l.b16 %v1418
    %v1633 = vunpack.c.h.b16 %v1418
    %v1634 = vunpack.c.l.b16 %v1419
    %v1635 = vunpack.c.l.b16 %v1420
    %v1636 = vunpack.c.h.b16 %v1420
    %v1637 = vunpack.c.l.b16 %v1421
    %v1638 = vunpack.c.l.b16 %v1422
    %v1639 = vunpack.c.h.b16 %v1422
    %v1640 = vunpack.c.l.b16 %v1423
    %v1641 = vunpack.c.l.b16 %v1424
    %v1642 = vunpack.c.h.b16 %v1424
    %v1643 = vunpack.c.l.b16 %v1425
    %v1644 = vunpack.c.l.b16 %v1426
    %v1645 = vunpack.c.h.b16 %v1426
    %v1646 = vunpack.c.l.b16 %v1427
    %v1647 = vunpack.c.l.b16 %v1428
    %v1648 = vunpack.c.h.b16 %v1428
    %v1649 = vunpack.c.l.b16 %v1429
    %v1650 = vunpack.c.l.b16 %v1430
    %v1651 = vunpack.c.h.b16 %v1430
    %v1652 = vunpack.c.l.b16 %v1431
    %v1653 = vunpack.c.l.b16 %v1432
    %v1654 = vunpack.c.h.b16 %v1432
    %v1655 = vunpack.c.l.b16 %v1433
    %v1656 = vunpack.c.l.b16 %v1434
    %v1657 = vunpack.c.h.b16 %v1434
    %v1658 = vunpack.c.l.b16 %v1435
    %v1659 = vunpack.c.l.b16 %v1436
    %v1660 = vunpack.c.h.b16 %v1436
    %v1661 = vunpack.c.l.b16 %v1437
    %v1662 = vunpack.c.l.b16 %v1438
    %v1663 = vunpack.c.h.b16 %v1438
    %v1664 = vunpack.c.l.b16 %v1439
    %v1665 = vunpack.c.l.b16 %v1440
    %v1666 = vunpack.c.h.b16 %v1440
    %v1667 = vunpack.c.l.b16 %v1441
    %v1668 = vunpack.c.l.b16 %v1442
    %v1669 = vunpack.c.h.b16 %v1442
    %v1670 = vunpack.c.l.b16 %v1443
    %v1671 = vunpack.c.l.b16 %v1444
    %v1672 = vunpack.c.h.b16 %v1444
    %v1673 = vunpack.c.l.b16 %v1445
    %v1674 = vunpack.c.l.b16 %v1446
    %v1675 = vunpack.c.h.b16 %v1446
    %v1676 = vunpack.c.l.b16 %v1447
    %v1677 = vunpack.c.l.b16 %v1448
    %v1678 = vunpack.c.h.b16 %v1448
    %v1679 = vunpack.c.l.b16 %v1449
    %v1680 = vunpack.c.l.b16 %v1450
    %v1681 = vunpack.c.h.b16 %v1450
    %v1682 = vunpack.c.l.b16 %v1451
    %v1683 = vunpack.c.l.b16 %v1452
    %v1684 = vunpack.c.h.b16 %v1452
    %v1685 = vunpack.c.l.b16 %v1453
    %v1686 = vunpack.c.l.b16 %v1454
    %v1687 = vunpack.c.h.b16 %v1454
    %v1688 = vunpack.c.l.b16 %v1455
    %v1689 = vunpack.c.l.b16 %v1456
    %v1690 = vunpack.c.h.b16 %v1456
    %v1691 = vunpack.c.l.b16 %v1457
    %v1692 = vunpack.c.l.b16 %v1458
    %v1693 = vunpack.c.h.b16 %v1458
    %v1694 = vunpack.c.l.b16 %v1459
    %v1695 = vunpack.c.l.b16 %v1460
    %v1696 = vunpack.c.h.b16 %v1460
    %v1697 = vunpack.c.l.b16 %v1461
    %v1698 = vunpack.c.l.b16 %v1462
    %v1699 = vunpack.c.h.b16 %v1462
    %v1700 = vunpack.c.l.b16 %v1463
    %v1701 = vunpack.c.l.b16 %v1464
    %v1702 = vunpack.c.h.b16 %v1464
    %v1703 = vunpack.c.l.b16 %v1465
    %v1704 = vunpack.c.l.b16 %v1466
    %v1705 = vunpack.c.h.b16 %v1466
    %v1706 = vunpack.c.l.b16 %v1467
    %v1707 = vunpack.c.l.b16 %v1468
    %v1708 = vunpack.c.h.b16 %v1468
    %v1709 = vunpack.c.l.b16 %v1469
    %v1710 = vunpack.c.l.b16 %v1470
    %v1711 = vunpack.c.h.b16 %v1470
    %v1712 = vunpack.c.l.b16 %v1471
    %v1713 = vunpack.c.l.b16 %v1472
    %v1714 = vunpack.c.h.b16 %v1472
    %v1715 = vunpack.c.l.b16 %v1473
    %v1716 = vunpack.c.l.b16 %v1474
    %v1717 = vunpack.c.h.b16 %v1474
    %v1718 = vunpack.c.l.b16 %v1475
    %v1719 = vunpack.c.l.b16 %v1476
    %v1720 = vunpack.c.h.b16 %v1476
    %v1721 = vunpack.c.l.b16 %v1477
    %v1722 = vunpack.c.l.b16 %v1478
    %v1723 = vunpack.c.h.b16 %v1478
    %v1724 = vunpack.c.l.b16 %v1479
    %v1725 = vunpack.c.l.b16 %v1480
    %v1726 = vunpack.c.h.b16 %v1480
    %v1727 = vunpack.c.l.b16 %v1481
    %v1728 = vunpack.c.l.b16 %v1482
    %v1729 = vunpack.c.h.b16 %v1482
    %v1730 = vunpack.c.l.b16 %v1483
    %v1731 = vunpack.c.l.b16 %v1484
    %v1732 = vunpack.c.h.b16 %v1484
    %v1733 = vunpack.c.l.b16 %v1485
    %v1734 = vunpack.c.l.b16 %v1486
    %v1735 = vunpack.c.h.b16 %v1486
    %v1736 = vunpack.c.l.b16 %v1487
    %v1737 = vunpack.c.l.b16 %v1488
    %v1738 = vunpack.c.h.b16 %v1488
    %v1739 = vunpack.c.l.b16 %v1489
    %v1740 = vunpack.c.l.b16 %v1490
    %v1741 = vunpack.c.h.b16 %v1490
    %v1742 = vunpack.c.l.b16 %v1491
    %v1743 = vunpack.c.l.b16 %v1492
    %v1744 = vunpack.c.h.b16 %v1492
    %v1745 = vunpack.c.l.b16 %v1493
    %v1746 = vunpack.c.l.b16 %v1494
    %v1747 = vunpack.c.h.b16 %v1494
    %v1748 = vunpack.c.l.b16 %v1495
    %v1749 = vunpack.c.l.b16 %v1496
    %v1750 = vunpack.c.h.b16 %v1496
    %v1751 = vunpack.c.l.b16 %v1497
    %v1752 = vunpack.c.l.b16 %v1498
    %v1753 = vunpack.c.h.b16 %v1498
    %v1754 = vunpack.c.l.b16 %v1499
    %v1755 = vunpack.c.l.b16 %v1500
    %v1756 = vunpack.c.h.b16 %v1500
    %v1757 = vunpack.c.l.b16 %v1501
    %v1758 = vunpack.c.l.b16 %v1502
    %v1759 = vunpack.c.h.b16 %v1502
    %v1760 = vunpack.c.l.b16 %v1503
    %v1761 = vpack.c.b16 %v1620, %v1617
    %v1762 = vpack.c.b16 %v1621, %v1618
    %v1763 = vpack.c.b16 %v1622, %v1619
    %v1764 = vpack.c.b16 %v1626, %v1623
    %v1765 = vpack.c.b16 %v1627, %v1624
    %v1766 = vpack.c.b16 %v1628, %v1625
    %v1767 = vpack.c.b16 %v1632, %v1629
    %v1768 = vpack.c.b16 %v1633, %v1630
    %v1769 = vpack.c.b16 %v1634, %v1631
    %v1770 = vpack.c.b16 %v1638, %v1635
    %v1771 = vpack.c.b16 %v1639, %v1636
    %v1772 = vpack.c.b16 %v1640, %v1637
    %v1773 = vpack.c.b16 %v1644, %v1641
    %v1774 = vpack.c.b16 %v1645, %v1642
    %v1775 = vpack.c.b16 %v1646, %v1643
    %v1776 = vpack.c.b16 %v1650, %v1647
    %v1777 = vpack.c.b16 %v1651, %v1648
    %v1778 = vpack.c.b16 %v1652, %v1649
    %v1779 = vpack.c.b16 %v1656, %v1653
    %v1780 = vpack.c.b16 %v1657, %v1654
    %v1781 = vpack.c.b16 %v1658, %v1655
    %v1782 = vpack.c.b16 %v1662, %v1659
    %v1783 = vpack.c.b16 %v1663, %v1660
    %v1784 = vpack.c.b16 %v1664, %v1661
    %v1785 = vpack.c.b16 %v1668, %v1665
    %v1786 = vpack.c.b16 %v1669, %v1666
    %v1787 = vpack.c.b16 %v1670, %v1667
    %v1788 = vpack.c.b16 %v1674, %v1671
    %v1789 = vpack.c.b16 %v1675, %v1672
    %v1790 = vpack.c.b16 %v1676, %v1673
    %v1791 = vpack.c.b16 %v1680, %v1677
    %v1792 = vpack.c.b16 %v1681, %v1678
    %v1793 = vpack.c.b16 %v1682, %v1679
    %v1794 = vpack.c.b16 %v1686, %v1683
    %v1795 = vpack.c.b16 %v1687, %v1684
    %v1796 = vpack.c.b16 %v1688, %v1685
    %v1797 = vpack.c.b16 %v1692, %v1689
    %v1798 = vpack.c.b16 %v1693, %v1690
    %v1799 = vpack.c.b16 %v1694, %v1691
    %v1800 = vpack.c.b16 %v1698, %v1695
    %v1801 = vpack.c.b16 %v1699, %v1696
    %v1802 = vpack.c.b16 %v1700, %v1697
    %v1803 = vpack.c.b16 %v1704, %v1701
    %v1804 = vpack.c.b16 %v1705, %v1702
    %v1805 = vpack.c.b16 %v1706, %v1703
    %v1806 = vpack.c.b16 %v1710, %v1707
    %v1807 = vpack.c.b16 %v1711, %v1708
    %v1808 = vpack.c.b16 %v1712, %v1709
    %v1809 = vpack.c.b16 %v1716, %v1713
    %v1810 = vpack.c.b16 %v1717, %v1714
    %v1811 = vpack.c.b16 %v1718, %v1715
    %v1812 = vpack.c.b16 %v1722, %v1719
    %v1813 = vpack.c.b16 %v1723, %v1720
    %v1814 = vpack.c.b16 %v1724, %v1721
    %v1815 = vpack.c.b16 %v1728, %v1725
    %v1816 = vpack.c.b16 %v1729, %v1726
    %v1817 = vpack.c.b16 %v1730, %v1727
    %v1818 = vpack.c.b16 %v1734, %v1731
    %v1819 = vpack.c.b16 %v1735, %v1732
    %v1820 = vpack.c.b16 %v1736, %v1733
    %v1821 = vpack.c.b16 %v1740, %v1737
    %v1822 = vpack.c.b16 %v1741, %v1738
    %v1823 = vpack.c.b16 %v1742, %v1739
    %v1824 = vpack.c.b16 %v1746, %v1743
    %v1825 = vpack.c.b16 %v1747, %v1744
    %v1826 = vpack.c.b16 %v1748, %v1745
    %v1827 = vpack.c.b16 %v1752, %v1749
    %v1828 = vpack.c.b16 %v1753, %v1750
    %v1829 = vpack.c.b16 %v1754, %v1751
    %v1830 = vpack.c.b16 %v1758, %v1755
    %v1831 = vpack.c.b16 %v1759, %v1756
    %v1832 = vpack.c.b16 %v1760, %v1757
    %1905 = vmatprep.subr.bf16.mxu0 %v1762
    %1906 = vmatpush1.bf16.msra.mxu0 %v1761
    %1907 = vmatprep.subr.bf16.mxu0 %v1765
    %1908 = vmatpush1.bf16.msra.mxu0 %v1764
    %1909 = vmatprep.subr.bf16.mxu0 %v1768
    %1910 = vmatpush1.bf16.msra.mxu0 %v1767
    %1911 = vmatprep.subr.bf16.mxu0 %v1771
    %1912 = vmatpush1.bf16.msra.mxu0 %v1770
    %1913 = vmatprep.subr.bf16.mxu0 %v1774
    %1914 = vmatpush1.bf16.msra.mxu0 %v1773
    %1915 = vmatprep.subr.bf16.mxu0 %v1777
    %1916 = vmatpush1.bf16.msra.mxu0 %v1776
    %1917 = vmatprep.subr.bf16.mxu0 %v1780
    %1918 = vmatpush1.bf16.msra.mxu0 %v1779
    %1919 = vmatprep.subr.bf16.mxu0 %v1783
    %1920 = vmatpush1.bf16.msra.mxu0 %v1782
    %1921 = vmatprep.subr.bf16.mxu0 %v1786
    %1922 = vmatpush1.bf16.msra.mxu0 %v1785
    %1923 = vmatprep.subr.bf16.mxu0 %v1789
    %1924 = vmatpush1.bf16.msra.mxu0 %v1788
    %1925 = vmatprep.subr.bf16.mxu0 %v1792
    %1926 = vmatpush1.bf16.msra.mxu0 %v1791
    %1927 = vmatprep.subr.bf16.mxu0 %v1795
    %1928 = vmatpush1.bf16.msra.mxu0 %v1794
    %1929 = vmatprep.subr.bf16.mxu0 %v1798
    %1930 = vmatpush1.bf16.msra.mxu0 %v1797
    %1931 = vmatprep.subr.bf16.mxu0 %v1801
    %1932 = vmatpush1.bf16.msra.mxu0 %v1800
    %1933 = vmatprep.subr.bf16.mxu0 %v1804
    %1934 = vmatpush1.bf16.msra.mxu0 %v1803
    %1935 = vmatprep.subr.bf16.mxu0 %v1807
    %1936 = vmatpush1.bf16.msra.mxu0 %v1806
    %1937 = vmatprep.mubr.bf16.mxu0 %v1406
    %1938 = vmatmul.mubr.bf16.gmra.mrb[0].mxu0 %v1405
    %v1939 = vpop.f32.mrb[0].mxu0
    %v1940 = vadd.f32 %v1509, %v1939
    %v1941 = vpop.f32.mrb[0].mxu0
    %v1942 = vadd.f32 %v1513, %v1941
    %v1943 = vpop.f32.mrb[0].mxu0
    %v1944 = vadd.f32 %v1509, %v1943
    %v1945 = vpop.f32.mrb[0].mxu0
    %v1946 = vadd.f32 %v1513, %v1945
    %1947 = vdwg.mxu0
    %1948 = vmatprep.subr.bf16.mxu0 %v1810
    %1949 = vmatpush1.bf16.msra.mxu0 %v1809
    %1950 = vmatprep.subr.bf16.mxu0 %v1813
    %1951 = vmatpush1.bf16.msra.mxu0 %v1812
    %1952 = vmatprep.subr.bf16.mxu0 %v1816
    %1953 = vmatpush1.bf16.msra.mxu0 %v1815
    %1954 = vmatprep.subr.bf16.mxu0 %v1819
    %1955 = vmatpush1.bf16.msra.mxu0 %v1818
    %1956 = vmatprep.subr.bf16.mxu0 %v1822
    %1957 = vmatpush1.bf16.msra.mxu0 %v1821
    %1958 = vmatprep.subr.bf16.mxu0 %v1825
    %1959 = vmatpush1.bf16.msra.mxu0 %v1824
    %1960 = vmatprep.subr.bf16.mxu0 %v1828
    %1961 = vmatpush1.bf16.msra.mxu0 %v1827
    %1962 = vmatprep.subr.bf16.mxu0 %v1831
    %1963 = vmatpush1.bf16.msra.mxu0 %v1830
    %1964 = vmatprep.subr.bf16.mxu0 0
    %1965 = vmatpush1.bf16.msra.mxu0 0
    %1966 = vmatprep.subr.bf16.mxu0 0
    %1967 = vmatpush1.bf16.msra.mxu0 0
    %1968 = vmatprep.subr.bf16.mxu0 0
    %1969 = vmatpush1.bf16.msra.mxu0 0
    %1970 = vmatprep.subr.bf16.mxu0 0
    %1971 = vmatpush1.bf16.msra.mxu0 0
    %1972 = vmatprep.subr.bf16.mxu0 0
    %1973 = vmatpush1.bf16.msra.mxu0 0
    %1974 = vmatprep.subr.bf16.mxu0 0
    %1975 = vmatpush1.bf16.msra.mxu0 0
    %1976 = vmatprep.subr.bf16.mxu0 0
    %1977 = vmatpush1.bf16.msra.mxu0 0
    %1978 = vmatprep.subr.bf16.mxu0 0
    %1979 = vmatpush1.bf16.msra.mxu0 0
    %1980 = vmatprep.mubr.bf16.mxu0 0
    %1981 = vmatmul.mubr.bf16.gmra.mrb[0].mxu0 %v1407
    %v1982 = vpop.f32.mrb[0].mxu0
    %v1983 = vadd.f32 %v1940, %v1982
    %v1984 = vpop.f32.mrb[0].mxu0
    %v1985 = vadd.f32 %v1942, %v1984
    %v1986 = vpop.f32.mrb[0].mxu0
    %v1987 = vadd.f32 %v1944, %v1986
    %v1988 = vpop.f32.mrb[0].mxu0
    %v1989 = vadd.f32 %v1946, %v1988
    %1990 = vdwg.mxu0
    %1991 = vmatprep.subr.bf16.mxu0 0
    %1992 = vmatpush1.bf16.msra.mxu0 %v1763
    %1993 = vmatprep.subr.bf16.mxu0 0
    %1994 = vmatpush1.bf16.msra.mxu0 %v1766
    %1995 = vmatprep.subr.bf16.mxu0 0
    %1996 = vmatpush1.bf16.msra.mxu0 %v1769
    %1997 = vmatprep.subr.bf16.mxu0 0
    %1998 = vmatpush1.bf16.msra.mxu0 %v1772
    %1999 = vmatprep.subr.bf16.mxu0 0
    %2000 = vmatpush1.bf16.msra.mxu0 %v1775
    %2001 = vmatprep.subr.bf16.mxu0 0
    %2002 = vmatpush1.bf16.msra.mxu0 %v1778
    %2003 = vmatprep.subr.bf16.mxu0 0
    %2004 = vmatpush1.bf16.msra.mxu0 %v1781
    %2005 = vmatprep.subr.bf16.mxu0 0
    %2006 = vmatpush1.bf16.msra.mxu0 %v1784
    %2007 = vmatprep.subr.bf16.mxu0 0
    %2008 = vmatpush1.bf16.msra.mxu0 %v1787
    %2009 = vmatprep.subr.bf16.mxu0 0
    %2010 = vmatpush1.bf16.msra.mxu0 %v1790
    %2011 = vmatprep.subr.bf16.mxu0 0
    %2012 = vmatpush1.bf16.msra.mxu0 %v1793
    %2013 = vmatprep.subr.bf16.mxu0 0
    %2014 = vmatpush1.bf16.msra.mxu0 %v1796
    %2015 = vmatprep.subr.bf16.mxu0 0
    %2016 = vmatpush1.bf16.msra.mxu0 %v1799
    %2017 = vmatprep.subr.bf16.mxu0 0
    %2018 = vmatpush1.bf16.msra.mxu0 %v1802
    %2019 = vmatprep.subr.bf16.mxu0 0
    %2020 = vmatpush1.bf16.msra.mxu0 %v1805
    %2021 = vmatprep.subr.bf16.mxu0 0
    %2022 = vmatpush1.bf16.msra.mxu0 %v1808
    %2023 = vmatprep.mubr.bf16.mxu0 %v1406
    %2024 = vmatmul.mubr.bf16.gmra.mrb[0].mxu0 %v1405
    %v2025 = vpop.f32.mrb[0].mxu0
    %v2026 = vadd.f32 %v1517, %v2025
    %v2027 = vpop.f32.mrb[0].mxu0
    %v2028 = vpop.f32.mrb[0].mxu0
    %v2029 = vadd.f32 %v1517, %v2028
    %v2030 = vpop.f32.mrb[0].mxu0
    %2031 = vdwg.mxu0
    %2032 = vmatprep.subr.bf16.mxu0 0
    %2033 = vmatpush1.bf16.msra.mxu0 %v1811
    %2034 = vmatprep.subr.bf16.mxu0 0
    %2035 = vmatpush1.bf16.msra.mxu0 %v1814
    %2036 = vmatprep.subr.bf16.mxu0 0
    %2037 = vmatpush1.bf16.msra.mxu0 %v1817
    %2038 = vmatprep.subr.bf16.mxu0 0
    %2039 = vmatpush1.bf16.msra.mxu0 %v1820
    %2040 = vmatprep.subr.bf16.mxu0 0
    %2041 = vmatpush1.bf16.msra.mxu0 %v1823
    %2042 = vmatprep.subr.bf16.mxu0 0
    %2043 = vmatpush1.bf16.msra.mxu0 %v1826
    %2044 = vmatprep.subr.bf16.mxu0 0
    %2045 = vmatpush1.bf16.msra.mxu0 %v1829
    %2046 = vmatprep.subr.bf16.mxu0 0
    %2047 = vmatpush1.bf16.msra.mxu0 %v1832
    %2048 = vmatprep.subr.bf16.mxu0 0
    %2049 = vmatpush1.bf16.msra.mxu0 0
    %2050 = vmatprep.subr.bf16.mxu0 0
    %2051 = vmatpush1.bf16.msra.mxu0 0
    %2052 = vmatprep.subr.bf16.mxu0 0
    %2053 = vmatpush1.bf16.msra.mxu0 0
    %2054 = vmatprep.subr.bf16.mxu0 0
    %2055 = vmatpush1.bf16.msra.mxu0 0
    %2056 = vmatprep.subr.bf16.mxu0 0
    %2057 = vmatpush1.bf16.msra.mxu0 0
    %2058 = vmatprep.subr.bf16.mxu0 0
    %2059 = vmatpush1.bf16.msra.mxu0 0
    %2060 = vmatprep.subr.bf16.mxu0 0
    %2061 = vmatpush1.bf16.msra.mxu0 0
    %2062 = vmatprep.subr.bf16.mxu0 0
    %2063 = vmatpush1.bf16.msra.mxu0 0
    %2064 = vmatprep.mubr.bf16.mxu0 0
    %2065 = vmatmul.mubr.bf16.gmra.mrb[0].mxu0 %v1407
    %v2066 = vpop.f32.mrb[0].mxu0
    %v2067 = vadd.f32 %v2026, %v2066
    %v2068 = vpop.f32.mrb[0].mxu0
    %v2069 = vpop.f32.mrb[0].mxu0
    %v2070 = vadd.f32 %v2029, %v2069
    %v2071 = vpop.f32.mrb[0].mxu0
    %2072 = vdwg.mxu0
    %v2073 = vmax.f32 %v1983, 0.0
    %v2074 = vmax.f32 %v1985, 0.0
    %v2075 = vmax.f32 %v2067, 0.0
    %v2076 = vmax.f32 %v1987, 0.0
    %v2077 = vmax.f32 %v1989, 0.0
    %v2078 = vmax.f32 %v2070, 0.0
    %v2079 = vpack.c.bf16 %v2076, %v2073
    %v2080 = vpack.c.bf16 %v2077, %v2074
    %v2081 = vpack.c.bf16 %v2078, %v2075
    %v2082 = vld [vmem:[%s5] sm:$0xf]
    %v2083 = vld [vmem:[%s5 + $0x4] sm:$0xf]
    %v2084 = vld [vmem:[%s5 + $0x8] sm:$0xf]
    %v2085 = vld [vmem:[%s5 + $0xc] sm:$0xf]
    %v2086 = vld [vmem:[%s5 + $0x10] sm:$0xf]
    %v2087 = vld [vmem:[%s5 + $0x14] sm:$0xf]
    %v2088 = vld [vmem:[%s5 + $0x18] sm:$0xf]
    %v2089 = vld [vmem:[%s5 + $0x1c] sm:$0xf]
    %v2090 = vld [vmem:[%s5 + $0x20] sm:$0xf]
    %v2091 = vld [vmem:[%s5 + $0x24] sm:$0xf]
    %v2092 = vld [vmem:[%s5 + $0x28] sm:$0xf]
    %v2093 = vld [vmem:[%s5 + $0x2c] sm:$0xf]
    %v2094 = vld [vmem:[%s5 + $0x30] sm:$0xf]
    %v2095 = vld [vmem:[%s5 + $0x34] sm:$0xf]
    %v2096 = vld [vmem:[%s5 + $0x38] sm:$0xf]
    %v2097 = vld [vmem:[%s5 + $0x3c] sm:$0xf]
    %v2098 = vld [vmem:[%s5 + $0x40] sm:$0xf]
    %v2099 = vld [vmem:[%s5 + $0x44] sm:$0xf]
    %v2100 = vld [vmem:[%s5 + $0x48] sm:$0xf]
    %v2101 = vld [vmem:[%s5 + $0x4c] sm:$0xf]
    %v2102 = vld [vmem:[%s5 + $0x50] sm:$0xf]
    %v2103 = vld [vmem:[%s5 + $0x54] sm:$0xf]
    %v2104 = vld [vmem:[%s5 + $0x58] sm:$0xf]
    %v2105 = vld [vmem:[%s5 + $0x5c] sm:$0xf]
    %v2106 = vld [vmem:[%s5 + $0x60] sm:$0xf]
    %v2107 = vld [vmem:[%s5 + $0x64] sm:$0xf]
    %v2108 = vld [vmem:[%s5 + $0x68] sm:$0xf]
    %v2109 = vld [vmem:[%s5 + $0x6c] sm:$0xf]
    %v2110 = vld [vmem:[%s5 + $0x70] sm:$0xf]
    %v2111 = vld [vmem:[%s5 + $0x74] sm:$0xf]
    %v2112 = vld [vmem:[%s5 + $0x78] sm:$0xf]
    %v2113 = vld [vmem:[%s5 + $0x7c] sm:$0xf]
    %v2114 = vld [vmem:[%s5 + $0x80] sm:$0xf]
    %v2115 = vld [vmem:[%s5 + $0x84] sm:$0xf]
    %v2116 = vld [vmem:[%s5 + $0x88] sm:$0xf]
    %v2117 = vld [vmem:[%s5 + $0x8c] sm:$0xf]
    %v2118 = vld [vmem:[%s5 + $0x90] sm:$0xf]
    %v2119 = vld [vmem:[%s5 + $0x94] sm:$0xf]
    %v2120 = vld [vmem:[%s5 + $0x98] sm:$0xf]
    %v2121 = vld [vmem:[%s5 + $0x9c] sm:$0xf]
    %v2122 = vld [vmem:[%s5 + $0xa0] sm:$0xf]
    %v2123 = vld [vmem:[%s5 + $0xa4] sm:$0xf]
    %v2124 = vld [vmem:[%s5 + $0xa8] sm:$0xf]
    %v2125 = vld [vmem:[%s5 + $0xac] sm:$0xf]
    %v2126 = vld [vmem:[%s5 + $0xb0] sm:$0xf]
    %v2127 = vld [vmem:[%s5 + $0xb4] sm:$0xf]
    %v2128 = vld [vmem:[%s5 + $0xb8] sm:$0xf]
    %v2129 = vld [vmem:[%s5 + $0xbc] sm:$0xf]
    %v2130 = vld [vmem:[%s6] sm:$0x1]
    %v2132 = vlaneseq
    %v2133 = vshrl.u32 %v2132, 7
    %v2134 = vsub.s32 0, %v2133
    %v2135 = vrot.slane %v2130, %v2134
    %v2185 = vunpack.c.l.b16 %v2082
    %v2186 = vunpack.c.l.b16 %v2083
    %v2187 = vunpack.c.l.b16 %v2084
    %v2188 = vunpack.c.l.b16 %v2085
    %v2189 = vunpack.c.l.b16 %v2086
    %v2190 = vunpack.c.l.b16 %v2087
    %v2191 = vunpack.c.l.b16 %v2088
    %v2192 = vunpack.c.l.b16 %v2089
    %v2193 = vunpack.c.l.b16 %v2090
    %v2194 = vunpack.c.l.b16 %v2091
    %v2195 = vunpack.c.l.b16 %v2092
    %v2196 = vunpack.c.l.b16 %v2093
    %v2197 = vunpack.c.l.b16 %v2094
    %v2198 = vunpack.c.l.b16 %v2095
    %v2199 = vunpack.c.l.b16 %v2096
    %v2200 = vunpack.c.l.b16 %v2097
    %v2201 = vunpack.c.l.b16 %v2098
    %v2202 = vunpack.c.l.b16 %v2099
    %v2203 = vunpack.c.l.b16 %v2100
    %v2204 = vunpack.c.l.b16 %v2101
    %v2205 = vunpack.c.l.b16 %v2102
    %v2206 = vunpack.c.l.b16 %v2103
    %v2207 = vunpack.c.l.b16 %v2104
    %v2208 = vunpack.c.l.b16 %v2105
    %v2209 = vunpack.c.l.b16 %v2106
    %v2210 = vunpack.c.l.b16 %v2107
    %v2211 = vunpack.c.l.b16 %v2108
    %v2212 = vunpack.c.l.b16 %v2109
    %v2213 = vunpack.c.l.b16 %v2110
    %v2214 = vunpack.c.l.b16 %v2111
    %v2215 = vunpack.c.l.b16 %v2112
    %v2216 = vunpack.c.l.b16 %v2113
    %v2217 = vunpack.c.l.b16 %v2114
    %v2218 = vunpack.c.l.b16 %v2115
    %v2219 = vunpack.c.l.b16 %v2116
    %v2220 = vunpack.c.l.b16 %v2117
    %v2221 = vunpack.c.l.b16 %v2118
    %v2222 = vunpack.c.l.b16 %v2119
    %v2223 = vunpack.c.l.b16 %v2120
    %v2224 = vunpack.c.l.b16 %v2121
    %v2225 = vunpack.c.l.b16 %v2122
    %v2226 = vunpack.c.l.b16 %v2123
    %v2227 = vunpack.c.l.b16 %v2124
    %v2228 = vunpack.c.l.b16 %v2125
    %v2229 = vunpack.c.l.b16 %v2126
    %v2230 = vunpack.c.l.b16 %v2127
    %v2231 = vunpack.c.l.b16 %v2128
    %v2232 = vunpack.c.l.b16 %v2129
    %v2233 = vpack.c.b16 %v2186, %v2185
    %v2234 = vpack.c.b16 %v2188, %v2187
    %v2235 = vpack.c.b16 %v2190, %v2189
    %v2236 = vpack.c.b16 %v2192, %v2191
    %v2237 = vpack.c.b16 %v2194, %v2193
    %v2238 = vpack.c.b16 %v2196, %v2195
    %v2239 = vpack.c.b16 %v2198, %v2197
    %v2240 = vpack.c.b16 %v2200, %v2199
    %v2241 = vpack.c.b16 %v2202, %v2201
    %v2242 = vpack.c.b16 %v2204, %v2203
    %v2243 = vpack.c.b16 %v2206, %v2205
    %v2244 = vpack.c.b16 %v2208, %v2207
    %v2245 = vpack.c.b16 %v2210, %v2209
    %v2246 = vpack.c.b16 %v2212, %v2211
    %v2247 = vpack.c.b16 %v2214, %v2213
    %v2248 = vpack.c.b16 %v2216, %v2215
    %v2249 = vpack.c.b16 %v2218, %v2217
    %v2250 = vpack.c.b16 %v2220, %v2219
    %v2251 = vpack.c.b16 %v2222, %v2221
    %v2252 = vpack.c.b16 %v2224, %v2223
    %v2253 = vpack.c.b16 %v2226, %v2225
    %v2254 = vpack.c.b16 %v2228, %v2227
    %v2255 = vpack.c.b16 %v2230, %v2229
    %v2256 = vpack.c.b16 %v2232, %v2231
    %2281 = vmatprep.subr.bf16.mxu0 0
    %2282 = vmatpush1.bf16.msra.mxu0 %v2233
    %2283 = vmatprep.subr.bf16.mxu0 0
    %2284 = vmatpush1.bf16.msra.mxu0 %v2234
    %2285 = vmatprep.subr.bf16.mxu0 0
    %2286 = vmatpush1.bf16.msra.mxu0 %v2235
    %2287 = vmatprep.subr.bf16.mxu0 0
    %2288 = vmatpush1.bf16.msra.mxu0 %v2236
    %2289 = vmatprep.subr.bf16.mxu0 0
    %2290 = vmatpush1.bf16.msra.mxu0 %v2237
    %2291 = vmatprep.subr.bf16.mxu0 0
    %2292 = vmatpush1.bf16.msra.mxu0 %v2238
    %2293 = vmatprep.subr.bf16.mxu0 0
    %2294 = vmatpush1.bf16.msra.mxu0 %v2239
    %2295 = vmatprep.subr.bf16.mxu0 0
    %2296 = vmatpush1.bf16.msra.mxu0 %v2240
    %2297 = vmatprep.subr.bf16.mxu0 0
    %2298 = vmatpush1.bf16.msra.mxu0 %v2241
    %2299 = vmatprep.subr.bf16.mxu0 0
    %2300 = vmatpush1.bf16.msra.mxu0 %v2242
    %2301 = vmatprep.subr.bf16.mxu0 0
    %2302 = vmatpush1.bf16.msra.mxu0 %v2243
    %2303 = vmatprep.subr.bf16.mxu0 0
    %2304 = vmatpush1.bf16.msra.mxu0 %v2244
    %2305 = vmatprep.subr.bf16.mxu0 0
    %2306 = vmatpush1.bf16.msra.mxu0 %v2245
    %2307 = vmatprep.subr.bf16.mxu0 0
    %2308 = vmatpush1.bf16.msra.mxu0 %v2246
    %2309 = vmatprep.subr.bf16.mxu0 0
    %2310 = vmatpush1.bf16.msra.mxu0 %v2247
    %2311 = vmatprep.subr.bf16.mxu0 0
    %2312 = vmatpush1.bf16.msra.mxu0 %v2248
    %2313 = vmatprep.mubr.bf16.mxu0 %v2080
    %2314 = vmatmul.mubr.bf16.gmra.mrb[0].mxu0 %v2079
    %v2315 = vpop.f32.mrb[0].mxu0
    %v2316 = vadd.f32 %v2135, %v2315
    %v2317 = vpop.f32.mrb[0].mxu0
    %v2318 = vpop.f32.mrb[0].mxu0
    %v2319 = vadd.f32 %v2135, %v2318
    %v2320 = vpop.f32.mrb[0].mxu0
    %2321 = vdwg.mxu0
    %2322 = vmatprep.subr.bf16.mxu0 0
    %2323 = vmatpush1.bf16.msra.mxu0 %v2249
    %2324 = vmatprep.subr.bf16.mxu0 0
    %2325 = vmatpush1.bf16.msra.mxu0 %v2250
    %2326 = vmatprep.subr.bf16.mxu0 0
    %2327 = vmatpush1.bf16.msra.mxu0 %v2251
    %2328 = vmatprep.subr.bf16.mxu0 0
    %2329 = vmatpush1.bf16.msra.mxu0 %v2252
    %2330 = vmatprep.subr.bf16.mxu0 0
    %2331 = vmatpush1.bf16.msra.mxu0 %v2253
    %2332 = vmatprep.subr.bf16.mxu0 0
    %2333 = vmatpush1.bf16.msra.mxu0 %v2254
    %2334 = vmatprep.subr.bf16.mxu0 0
    %2335 = vmatpush1.bf16.msra.mxu0 %v2255
    %2336 = vmatprep.subr.bf16.mxu0 0
    %2337 = vmatpush1.bf16.msra.mxu0 %v2256
    %2338 = vmatprep.subr.bf16.mxu0 0
    %2339 = vmatpush1.bf16.msra.mxu0 0
    %2340 = vmatprep.subr.bf16.mxu0 0
    %2341 = vmatpush1.bf16.msra.mxu0 0
    %2342 = vmatprep.subr.bf16.mxu0 0
    %2343 = vmatpush1.bf16.msra.mxu0 0
    %2344 = vmatprep.subr.bf16.mxu0 0
    %2345 = vmatpush1.bf16.msra.mxu0 0
    %2346 = vmatprep.subr.bf16.mxu0 0
    %2347 = vmatpush1.bf16.msra.mxu0 0
    %2348 = vmatprep.subr.bf16.mxu0 0
    %2349 = vmatpush1.bf16.msra.mxu0 0
    %2350 = vmatprep.subr.bf16.mxu0 0
    %2351 = vmatpush1.bf16.msra.mxu0 0
    %2352 = vmatprep.subr.bf16.mxu0 0
    %2353 = vmatpush1.bf16.msra.mxu0 0
    %2354 = vmatprep.mubr.bf16.mxu0 0
    %2355 = vmatmul.mubr.bf16.gmra.mrb[0].mxu0 %v2081
    %v2356 = vpop.f32.mrb[0].mxu0
    %v2357 = vadd.f32 %v2316, %v2356
    %v2358 = vpop.f32.mrb[0].mxu0
    %v2359 = vpop.f32.mrb[0].mxu0
    %v2360 = vadd.f32 %v2319, %v2359
    %v2361 = vpop.f32.mrb[0].mxu0
    %2362 = vdwg.mxu0
    %v2363 = vxor.u32 %v2357, 2147483648
    %v2364 = vxor.u32 %v2360, 2147483648
    %v2365 = vmul.f32 %v2363, 1.442695
    %v2366 = vpow.pop %v2365
    %v2367 = vmul.f32 %v2364, 1.442695
    %v2368 = vpow.pop %v2367
    %v2369 = vadd.f32 %v2366, 1.0
    %v2370 = vadd.f32 %v2368, 1.0
    %v2371 = vrcp.pop %v2369
    %v2372 = vmul.f32 1.0, %v2371
    %v2373 = vrcp.pop %v2370
    %v2374 = vmul.f32 1.0, %v2373
    %v2375 = vpack.c.bf16 %v2374, %v2372
    %v2377 = vunpack.c.l.b16 %v2375
    %v2378 = vunpack.c.h.b16 %v2375
    %v2379 = vpack.c.b16 %v2377, %v2377
    %v2380 = vpack.c.b16 %v2378, %v2378
    %2383 = vst [vmem:[#allocation4] sm:$0xf] %v2379
    %2384 = vst [vmem:[#allocation4 + $0x4] sm:$0xf] %v2380
    // Predicated region
    $region34: #{encoder_forward.1} parent=1 // pred_check
      _
    $region35: #{encoder_forward.1} parent=1 // pred_check_branch
      %2386 = sbr.rel (0) target = $region37
    $region36: #{encoder_forward.1} parent=1 // pred_region
      // Predicated region
      $region38: #{encoder_forward.1} parent=36 // pred_check
        _
      $region39: #{encoder_forward.1} parent=36 // pred_check_branch
        %2388 = sbr.rel (0) target = $region41
      $region40: #{encoder_forward.1} parent=36 // pred_region
        // Predicated region
        $region42: #{encoder_forward.1} parent=40 // pred_check
          _
        $region43: #{encoder_forward.1} parent=40 // pred_check_branch
          %2390 = sbr.rel target = $region45
        $region44: #{encoder_forward.1} parent=40 // pred_region
          // Predicated region
          $region57: #{encoder_forward.1} parent=44 // pred_check
            _
          $region58: #{encoder_forward.1} parent=44 // pred_check_branch
            %2405 = sbr.rel (0) target = $region60
          $region59: #{encoder_forward.1} parent=44 // pred_region
            loop: start=0, step=1, limit=1
            $region61: #{encoder_forward.1} parent=59 // loop_pre_header
              _
            $region62: #{encoder_forward.1} parent=59 // loop_header
              %s2408 = sphi 0, %s2412
              %p2409 = scmp.ge.s32.totalorder %s2408, 1
              %s2413 = sphi [#allocation4], [#allocation4]
              %s2414 = sphi %s7, %s7
            $region63: #{encoder_forward.1} parent=59 // loop_header_branch
              %2411 = sbr.rel (%p2409) target = $region67
            $region64: #{encoder_forward.1} parent=59 // loop_body
              %v2415 = vld [vmem:[%s2413] sm:$0xf]
              %2416 = vst [vmem:[%s2414] sm:$0xf] %v2415
            $region65: #{encoder_forward.1} parent=59 // loop_footer
              %s2412 = sadd.s32 1, %s2408
            $region66: #{encoder_forward.1} parent=59 // loop_footer_branch
              %2407 = sbr.rel target = $region62
            $region67: #{encoder_forward.1} parent=59 // loop_exit
              _
          $region60: #{encoder_forward.1} parent=44 // pred_fallthru
            _
        $region45: #{encoder_forward.1} parent=40 // pred_fallthru
          _
        // Predicated region
        $region46: #{encoder_forward.1} parent=40 // pred_check
          _
        $region47: #{encoder_forward.1} parent=40 // pred_check_branch
          %2392 = sbr.rel (0) target = $region49
        $region48: #{encoder_forward.1} parent=40 // pred_region
          loop: start=0, step=1, limit=1
          $region50: #{encoder_forward.1} parent=48 // loop_pre_header
            _
          $region51: #{encoder_forward.1} parent=48 // loop_header
            %s2395 = sphi 0, %s2399
            %p2396 = scmp.ge.s32.totalorder %s2395, 1
            %s2400 = sphi [#allocation4], [#allocation4]
            %s2401 = sphi %s7, %s7
          $region52: #{encoder_forward.1} parent=48 // loop_header_branch
            %2398 = sbr.rel (%p2396) target = $region56
          $region53: #{encoder_forward.1} parent=48 // loop_body
            %v2402 = vld [vmem:[%s2400] sm:$0xf]
            %2403 = vst [vmem:[%s2401] sm:$0xf] %v2402
          $region54: #{encoder_forward.1} parent=48 // loop_footer
            %s2399 = sadd.s32 1, %s2395
          $region55: #{encoder_forward.1} parent=48 // loop_footer_branch
            %2394 = sbr.rel target = $region51
          $region56: #{encoder_forward.1} parent=48 // loop_exit
            _
        $region49: #{encoder_forward.1} parent=40 // pred_fallthru
          _
      $region41: #{encoder_forward.1} parent=36 // pred_fallthru
        _
      %2417 = vnop
    $region37: #{encoder_forward.1} parent=1 // pred_fallthru
      _
    // Predicated region
    $region68: #{encoder_forward.1} parent=1 // pred_check
      _
    $region69: #{encoder_forward.1} parent=1 // pred_check_branch
      %2419 = sbr.rel (0) target = $region71
    $region70: #{encoder_forward.1} parent=1 // pred_region
      _
    $region71: #{encoder_forward.1} parent=1 // pred_fallthru
      _
    %2420 = vsyncpa [#allocation3], 1

</llo_original>
